<compile_context>
chip_gen: v7x
topology: tpu7x:2x2x1
jax: 0.10.0
libtpu: 0.0.40
codegen_flags: <defaults>
</compile_context>

<pallas_src>
import math
from functools import partial

import jax
import jax.numpy as jnp
from jax.experimental import pallas as pl
from jax.experimental.pallas import tpu as pltpu


def encoding_kernel(x_ref, we1_ref, w23_ref, g_ref, out_ref, *, n_way, n_support):
    f32 = jnp.float32
    N = n_way * n_support                 # support samples per episode
    GN, _ = x_ref.shape                   # G episodes * N samples
    G = GN // N                           # episodes handled in this grid step
    E = g_ref.shape[1]                    # encoder_dim
    E2 = 2 * E

    # Fused encoding_layer + relation-net layer 1 (applied before pairwise
    # replication; a linear layer commutes with replication):
    #   proj[:, :2E] = enc @ W1[:E, :]   (lhs contribution per sample)
    #   proj[:, 2E:] = enc @ W1[E:, :]   (rhs contribution per sample)
    proj = jnp.dot(x_ref[...], we1_ref[...], preferred_element_type=f32)  # (G*N, 4E)
    a = proj[:, :E2]                                                      # (G*N, 2E)
    b = proj[:, E2:]                                                      # (G*N, 2E)

    # Pairwise rows h1[g*N*N + i*N + j] = a[g*N+i] + b[g*N+j], built with
    # layout-preserving broadcast+reshape (sublane strides, single VPU add).
    a_rep = jnp.broadcast_to(a[:, None, :], (GN, N, E2)).reshape(GN * N, E2)
    b_rep = jnp.broadcast_to(
        b.reshape(G, 1, N, E2), (G, N, N, E2)).reshape(GN * N, E2)
    h1 = jnp.maximum(a_rep + b_rep, 0.0)                                  # (G*N*N, 2E)

    # relation_net layer 2 — the one full-size matmul (rows = G*N*N fills the
    # MXU M dimension across the episode block).
    h2 = jnp.maximum(jnp.dot(h1, w23_ref[0], preferred_element_type=f32), 0.0)

    # The mean over the pairwise index j and the per-class mean over shots are
    # jointly a mean over contiguous row blocks of n_support * N.  The reshape
    # only splits the sublane axis (block = 16 rows, multiple of 8), so it is
    # layout preserving.  The mean commutes with W3, so pool first and apply
    # W3 on the tiny (G*n_way, 2E) pooled tensor.
    pooled = jnp.mean(h2.reshape(G * n_way, n_support * N, E2), axis=1)   # (G*n_way, 2E)
    per_class = jnp.dot(pooled, w23_ref[1], preferred_element_type=f32)   # (G*n_way, 2E)

    means = per_class[:, :E]
    stds = jnp.logaddexp(per_class[:, E:], 0.0)   # softplus, matches F.softplus

    out = g_ref[...] * stds + means               # reparameterized sample

    # Per-element KL terms of NormalDistribution.kl_divergence.  The
    # 0.5*log(2*pi) terms cancel and (1 + 1e-10) == 1 exactly in float32, so
    # lp1 - lp0 simplifies to the expression below.
    eps = 1e-10
    kl_terms = (0.5 * out * out
                - 0.5 * ((out - means) / (stds + eps)) ** 2
                - jnp.log(stds + eps))

    # Single lane-dense (G*n_way, 2E) store: [ output | per-element KL terms ].
    out_ref[...] = jnp.concatenate([out, kl_terms], axis=1)


@partial(jax.jit, static_argnames=("n_way", "n_support", "episodes_per_step"))
def encoding_network_forward(x_support, params, gaussian, *, n_way, n_support,
                             episodes_per_step=8):
    """Batched LEO encoding-network forward pass as one Pallas kernel.

    Args:
      x_support: (B, N, x_dim) support sets, N = n_way * n_support, shots of
        the same class contiguous (as in the PyTorch module).
      params: dict with we (x_dim, E), w1/w2/w3 (2E, 2E), stored (in, out).
      gaussian: (B, n_way, E) standard-normal samples (reparameterization).

    Returns:
      out: (B, n_way, E) sampled latents, kl: (B,) KL divergences.
    """
    B, N, x_dim = x_support.shape
    assert N == n_way * n_support
    E = params["we"].shape[1]
    E2 = 2 * E

    G = episodes_per_step
    assert B % G == 0, "batch of episodes must be a multiple of episodes_per_step"

    # Pack weights (runs fused inside the jit; no per-call host constants).
    w1 = params["w1"]
    w1p = jnp.concatenate([w1[:E, :], w1[E:, :]], axis=1)          # (E, 4E)
    w_enc1 = jnp.dot(params["we"], w1p)                            # (x_dim, 4E)
    w23 = jnp.stack([params["w2"], params["w3"]], axis=0)          # (2, 2E, 2E)

    # Fold the episode axis into sublanes so every block is lane-dense and the
    # stores are unmasked.
    x2 = x_support.reshape(B * N, x_dim)
    g2 = gaussian.reshape(B * n_way, E)

    slab = pl.pallas_call(
        partial(encoding_kernel, n_way=n_way, n_support=n_support),
        out_shape=jax.ShapeDtypeStruct((B * n_way, E2), jnp.float32),
        grid_spec=pltpu.PrefetchScalarGridSpec(
            num_scalar_prefetch=0,
            grid=(B // G,),
            in_specs=[
                # Per-episode-group blocks (pipelined DMA).
                pl.BlockSpec((G * N, x_dim), lambda b: (b, 0)),
                # Weight slabs: same block every step -> resident in VMEM.
                pl.BlockSpec((x_dim, 4 * E), lambda b: (0, 0)),
                pl.BlockSpec((2, E2, E2), lambda b: (0, 0, 0)),
                pl.BlockSpec((G * n_way, E), lambda b: (b, 0)),
            ],
            out_specs=pl.BlockSpec((G * n_way, E2), lambda b: (b, 0)),
        ),
        # Episode axis is embarrassingly parallel -> both TCs on v7x.
        # Per-step working set (G=8): ~0.5 MiB for h1+h2, well under the
        # default scoped VMEM on every generation; re-budget if G grows.
        compiler_params=pltpu.CompilerParams(
            dimension_semantics=("parallel",)),
    )(x2, w_enc1, w23, g2)

    slab = slab.reshape(B, n_way, E2)
    out = slab[:, :, :E]
    kl = jnp.mean(slab[:, :, E:], axis=(1, 2))
    return out, kl


def encoding_network_reference(x_support, params, gaussian, *, n_way, n_support):
    """Plain-JAX single-episode reference mirroring the PyTorch forward
    (dropout = identity)."""
    N = n_way * n_support
    E = params["we"].shape[1]
    enc = x_support @ params["we"]                                    # (N, E)
    lhs = jnp.broadcast_to(enc[:, None, :], (N, N, E))
    rhs = jnp.broadcast_to(enc[None, :, :], (N, N, E))
    h = jnp.concatenate([lhs, rhs], axis=-1)                          # (N, N, 2E)
    h = jnp.maximum(h @ params["w1"], 0.0)
    h = jnp.maximum(h @ params["w2"], 0.0)
    h = h @ params["w3"]
    per_row = h.mean(axis=1)                                          # (N, 2E)
    per_class = per_row.reshape(n_way, n_support, 2 * E).mean(axis=1) # (n_way, 2E)
    means, stds_raw = per_class[:, :E], per_class[:, E:]
    stds = jnp.logaddexp(stds_raw, 0.0)
    out = gaussian * stds + means
    eps = 1e-10
    half_log_2pi = 0.5 * math.log(2.0 * math.pi)
    lp1 = -0.5 * ((out - means) / (stds + eps)) ** 2 - jnp.log(stds + eps) - half_log_2pi
    lp0 = -0.5 * (out / (1.0 + eps)) ** 2 - jnp.log(jnp.float32(1.0 + eps)) - half_log_2pi
    kl = jnp.mean(lp1 - lp0)
    return out, kl


if __name__ == "__main__":
    # Small, tile-friendly shapes consistent with the module.
    n_way, n_support = 4, 2
    N = n_way * n_support           # 8 support samples per episode
    x_dim = 16
    encoder_dim = 64                # 2 * encoder_dim = 128 (lane-aligned)
    B = 16                          # episodes in the batch (8 per grid step)

    key = jax.random.PRNGKey(0)
    k_x, k_we, k_w1, k_w2, k_w3, k_g = jax.random.split(key, 6)

    x_support = jax.random.normal(k_x, (B, N, x_dim), dtype=jnp.float32)

    # Deterministic parameter init (uniform ~ PyTorch Linear default scale).
    def init_linear(k, fan_in, fan_out):
        bound = 1.0 / math.sqrt(fan_in)
        return jax.random.uniform(k, (fan_in, fan_out), jnp.float32, -bound, bound)

    params = {
        "we": init_linear(k_we, x_dim, encoder_dim),
        "w1": init_linear(k_w1, 2 * encoder_dim, 2 * encoder_dim),
        "w2": init_linear(k_w2, 2 * encoder_dim, 2 * encoder_dim),
        "w3": init_linear(k_w3, 2 * encoder_dim, 2 * encoder_dim),
    }
    # Standard-normal samples used by NormalDistribution (reparameterization).
    gaussian = jax.random.normal(k_g, (B, n_way, encoder_dim), dtype=jnp.float32)

    out, kl = encoding_network_forward(
        x_support, params, gaussian,
        n_way=n_way, n_support=n_support, episodes_per_step=8)
    out = jax.block_until_ready(out)
    kl = jax.block_until_ready(kl)

    ref_out, ref_kl = jax.vmap(
        lambda xb, gb: encoding_network_reference(
            xb, params, gb, n_way=n_way, n_support=n_support)
    )(x_support, gaussian)

    assert out.shape == (B, n_way, encoder_dim)
    assert kl.shape == (B,)
    assert jnp.allclose(out, ref_out, rtol=1e-4, atol=1e-4)
    assert jnp.allclose(kl, ref_kl, rtol=1e-4, atol=1e-4)

    print("KERNEL_OK")
</pallas_src>

<mosaic_0001>
module attributes {stable_mosaic.version = 11 : i64} {
  func.func @encoding_kernel(%arg0: i32, %arg1: memref<64x16xf32, #tpu.memory_space<vmem>>, %arg2: memref<16x256xf32, #tpu.memory_space<vmem>>, %arg3: memref<2x128x128xf32, #tpu.memory_space<vmem>>, %arg4: memref<32x64xf32, #tpu.memory_space<vmem>>, %arg5: memref<32x128xf32, #tpu.memory_space<vmem>>) attributes {dimension_semantics = [#tpu.dimension_semantics<parallel>], iteration_bounds = array<i64: 2>, scalar_prefetch = 0 : i64, scratch_operands = 0 : i64, tpu.core_type = #tpu.core_type<tc>, window_params = [{transform_indices = @transform_0, window_bounds = array<i64: 64, 16>}, {pipeline_mode = #tpu.pipeline_mode<synchronous>, transform_indices = @transform_1, window_bounds = array<i64: 16, 256>}, {pipeline_mode = #tpu.pipeline_mode<synchronous>, transform_indices = @transform_2, window_bounds = array<i64: 2, 128, 128>}, {transform_indices = @transform_3, window_bounds = array<i64: 32, 64>}, {transform_indices = @transform_4, window_bounds = array<i64: 32, 128>}]} {
    %c0 = arith.constant 0 : index
    %c0_0 = arith.constant 0 : index
    %0 = vector.load %arg1[%c0, %c0_0] : memref<64x16xf32, #tpu.memory_space<vmem>>, vector<64x16xf32>
    %c0_1 = arith.constant 0 : index
    %c0_2 = arith.constant 0 : index
    %1 = vector.load %arg2[%c0_1, %c0_2] : memref<16x256xf32, #tpu.memory_space<vmem>>, vector<16x256xf32>
    %cst = arith.constant dense<0.000000e+00> : vector<64x256xf32>
    %2 = tpu.matmul %0, %1, %cst {dimension_numbers = #tpu.dot_dimension_numbers<[1], [0], [0], [1], [0, 0, 1, 1], [], []>} : vector<64x16xf32>, vector<16x256xf32>, vector<64x256xf32> -> vector<64x256xf32>
    %3 = vector.extract_strided_slice %2 {offsets = [0, 0], sizes = [64, 128], strides = [1, 1]} : vector<64x256xf32> to vector<64x128xf32>
    %4 = vector.extract_strided_slice %2 {offsets = [0, 128], sizes = [64, 128], strides = [1, 1]} : vector<64x256xf32> to vector<64x128xf32>
    %5 = vector.shape_cast %3 : vector<64x128xf32> to vector<64x1x128xf32>
    %6 = vector.shape_cast %5 : vector<64x1x128xf32> to vector<64x1x128xf32>
    %7 = vector.broadcast %6 : vector<64x1x128xf32> to vector<64x8x128xf32>
    %8 = vector.shape_cast %7 : vector<64x8x128xf32> to vector<512x128xf32>
    %9 = vector.shape_cast %4 : vector<64x128xf32> to vector<8x1x8x128xf32>
    %10 = vector.shape_cast %9 : vector<8x1x8x128xf32> to vector<8x1x8x128xf32>
    %11 = vector.broadcast %10 : vector<8x1x8x128xf32> to vector<8x8x8x128xf32>
    %12 = vector.shape_cast %11 : vector<8x8x8x128xf32> to vector<512x128xf32>
    %13 = arith.addf %8, %12 : vector<512x128xf32>
    %cst_3 = arith.constant 0.000000e+00 : f32
    %14 = vector.broadcast %cst_3 : f32 to vector<512x128xf32>
    %15 = arith.maximumf %13, %14 : vector<512x128xf32>
    %c0_4 = arith.constant 0 : index
    %c0_5 = arith.constant 0 : index
    %c0_6 = arith.constant 0 : index
    %16 = vector.load %arg3[%c0_4, %c0_5, %c0_6] : memref<2x128x128xf32, #tpu.memory_space<vmem>>, vector<1x128x128xf32>
    %17 = vector.shape_cast %16 : vector<1x128x128xf32> to vector<128x128xf32>
    %cst_7 = arith.constant dense<0.000000e+00> : vector<512x128xf32>
    %18 = tpu.matmul %15, %17, %cst_7 {dimension_numbers = #tpu.dot_dimension_numbers<[1], [0], [0], [1], [0, 0, 1, 1], [], []>} : vector<512x128xf32>, vector<128x128xf32>, vector<512x128xf32> -> vector<512x128xf32>
    %cst_8 = arith.constant 0.000000e+00 : f32
    %19 = vector.broadcast %cst_8 : f32 to vector<512x128xf32>
    %20 = arith.maximumf %18, %19 : vector<512x128xf32>
    %21 = vector.shape_cast %20 : vector<512x128xf32> to vector<32x16x128xf32>
    %cst_9 = arith.constant dense<0.000000e+00> : vector<32x128xf32>
    %22 = vector.multi_reduction <add>, %21, %cst_9 [1] : vector<32x16x128xf32> to vector<32x128xf32>
    %cst_10 = arith.constant 1.600000e+01 : f32
    %23 = vector.broadcast %cst_10 : f32 to vector<32x128xf32>
    %24 = arith.divf %22, %23 : vector<32x128xf32>
    %c1 = arith.constant 1 : index
    %c0_11 = arith.constant 0 : index
    %c0_12 = arith.constant 0 : index
    %25 = vector.load %arg3[%c1, %c0_11, %c0_12] : memref<2x128x128xf32, #tpu.memory_space<vmem>>, vector<1x128x128xf32>
    %26 = vector.shape_cast %25 : vector<1x128x128xf32> to vector<128x128xf32>
    %cst_13 = arith.constant dense<0.000000e+00> : vector<32x128xf32>
    %27 = tpu.matmul %24, %26, %cst_13 {dimension_numbers = #tpu.dot_dimension_numbers<[1], [0], [0], [1], [0, 0, 1, 1], [], []>} : vector<32x128xf32>, vector<128x128xf32>, vector<32x128xf32> -> vector<32x128xf32>
    %28 = vector.extract_strided_slice %27 {offsets = [0, 0], sizes = [32, 64], strides = [1, 1]} : vector<32x128xf32> to vector<32x64xf32>
    %29 = vector.extract_strided_slice %27 {offsets = [0, 64], sizes = [32, 64], strides = [1, 1]} : vector<32x128xf32> to vector<32x64xf32>
    %cst_14 = arith.constant 0.000000e+00 : f32
    %30 = vector.broadcast %cst_14 : f32 to vector<32x64xf32>
    %31 = arith.maximumf %29, %30 : vector<32x64xf32>
    %32 = vector.broadcast %cst_14 : f32 to vector<32x64xf32>
    %33 = arith.subf %29, %32 : vector<32x64xf32>
    %34 = arith.cmpf one, %33, %33 : vector<32x64xf32>
    %35 = vector.broadcast %cst_14 : f32 to vector<32x64xf32>
    %36 = arith.addf %29, %35 : vector<32x64xf32>
    %37 = math.absf %33 : vector<32x64xf32>
    %cst_15 = arith.constant 0.000000e+00 : f32
    %38 = vector.broadcast %cst_15 : f32 to vector<32x64xf32>
    %39 = arith.subf %38, %37 : vector<32x64xf32>
    %40 = math.exp %39 : vector<32x64xf32>
    %41 = math.log1p %40 : vector<32x64xf32>
    %42 = arith.addf %31, %41 : vector<32x64xf32>
    %43 = arith.select %34, %36, %42 : vector<32x64xi1>, vector<32x64xf32>
    %c0_16 = arith.constant 0 : index
    %c0_17 = arith.constant 0 : index
    %44 = vector.load %arg4[%c0_16, %c0_17] : memref<32x64xf32, #tpu.memory_space<vmem>>, vector<32x64xf32>
    %45 = arith.mulf %44, %43 : vector<32x64xf32>
    %46 = arith.addf %45, %28 : vector<32x64xf32>
    %cst_18 = arith.constant 5.000000e-01 : f32
    %47 = vector.broadcast %cst_18 : f32 to vector<32x64xf32>
    %48 = arith.mulf %47, %46 : vector<32x64xf32>
    %49 = arith.mulf %48, %46 : vector<32x64xf32>
    %50 = arith.subf %46, %28 : vector<32x64xf32>
    %cst_19 = arith.constant 1.000000e-10 : f32
    %51 = vector.broadcast %cst_19 : f32 to vector<32x64xf32>
    %52 = arith.addf %43, %51 : vector<32x64xf32>
    %53 = arith.divf %50, %52 : vector<32x64xf32>
    %54 = arith.mulf %53, %53 : vector<32x64xf32>
    %cst_20 = arith.constant 5.000000e-01 : f32
    %55 = vector.broadcast %cst_20 : f32 to vector<32x64xf32>
    %56 = arith.mulf %55, %54 : vector<32x64xf32>
    %57 = arith.subf %49, %56 : vector<32x64xf32>
    %cst_21 = arith.constant 1.000000e-10 : f32
    %58 = vector.broadcast %cst_21 : f32 to vector<32x64xf32>
    %59 = arith.addf %43, %58 : vector<32x64xf32>
    %60 = math.log %59 : vector<32x64xf32>
    %61 = arith.subf %57, %60 : vector<32x64xf32>
    %62 = tpu.concatenate %46, %61 in 1 : vector<32x64xf32>, vector<32x64xf32> -> vector<32x128xf32>
    %c0_22 = arith.constant 0 : index
    %c0_23 = arith.constant 0 : index
    %63 = vector.load %arg5[%c0_22, %c0_23] : memref<32x128xf32, #tpu.memory_space<vmem>>, vector<32x128xf32>
    tpu.vector_store %arg5[%c0_22, %c0_23], %62 {strides = array<i32>} : memref<32x128xf32, #tpu.memory_space<vmem>>, vector<32x128xf32>,
    return
  }
  func.func @transform_0(%arg0: i32) -> (i32, i32) {
    %c0_i32 = arith.constant 0 : i32
    %c0_i32_0 = arith.constant 0 : i32
    return %arg0, %c0_i32 : i32, i32
  }
  func.func @transform_1(%arg0: i32) -> (i32, i32) {
    %c0_i32 = arith.constant 0 : i32
    %c0_i32_0 = arith.constant 0 : i32
    %c0_i32_1 = arith.constant 0 : i32
    return %c0_i32, %c0_i32_0 : i32, i32
  }
  func.func @transform_2(%arg0: i32) -> (i32, i32, i32) {
    %c0_i32 = arith.constant 0 : i32
    %c0_i32_0 = arith.constant 0 : i32
    %c0_i32_1 = arith.constant 0 : i32
    %c0_i32_2 = arith.constant 0 : i32
    return %c0_i32, %c0_i32_0, %c0_i32_1 : i32, i32, i32
  }
  func.func @transform_3(%arg0: i32) -> (i32, i32) {
    %c0_i32 = arith.constant 0 : i32
    %c0_i32_0 = arith.constant 0 : i32
    return %arg0, %c0_i32 : i32, i32
  }
  func.func @transform_4(%arg0: i32) -> (i32, i32) {
    %c0_i32 = arith.constant 0 : i32
    %c0_i32_0 = arith.constant 0 : i32
    return %arg0, %c0_i32 : i32, i32
  }
}

</mosaic_0001>

<llo_original>
// kernel: encoding_network_forward.1
$region0: #{encoding_network_forward.1}
  #allocation0 [shape = 'u32[]', space=smem, size = 0x4, offset = 0x4, fixed_abs, tag = 'smem constant byte address 0x4 - core index']
  #allocation1 [shape = 'u32[144,128]{1,0:T(1,128)}', space=vmem, size = 0x12000, scoped, tag = 'internal scratch']
  %s0 = inlined_call_operand.vmem [shape: f32[128,16], index: 0, kind: input, shape index: {}]
  %s1 = inlined_call_operand.vmem [shape: f32[16,256], index: 1, kind: input, shape index: {}]
  %s2 = inlined_call_operand.vmem [shape: f32[2,128,128], index: 2, kind: input, shape index: {}]
  %s3 = inlined_call_operand.vmem [shape: f32[64,64], index: 3, kind: input, shape index: {}]
  %s4 = inlined_call_operand.vmem [shape: f32[64,128], index: 4, kind: output, shape index: {}]
  %s5 = sld [smem:[#allocation0]]
  $region49: #{encoding_network_forward.1} parent=0
    _
  %s7 = ssub.s32 1, %s5
  %s8 = scalar_select 0, %s7, %s5
  loop: start=0, step=1, limit=4
  $region2: #{encoding_network_forward.1} parent=0 // loop_pre_header
    _
  $region3: #{encoding_network_forward.1} parent=0 // loop_header
    %s10 = sphi 0, %s14
    %p11 = scmp.ge.s32.totalorder %s10, 4
    %s20 = sphi 0, %s22
    %s23 = sphi 0, %s20
    %s24 = sphi 0, %s23
    %s40 = sphi 0, %s24
    %s44 = sphi 0, %s44
    %s46 = sphi 0, %s44
    %s47 = sphi 0, %s46
    %s61 = sphi 0, %s47
    %s65 = sphi 0, %s65
    %s67 = sphi 0, %s65
    %s68 = sphi 0, %s67
    %s82 = sphi 0, %s68
    %s88 = sphi 0, %s90
    %s91 = sphi 0, %s88
    %s92 = sphi 0, %s91
    %s108 = sphi 0, %s92
    %s114 = sphi 0, %s116
    %s117 = sphi 0, %s114
    %s118 = sphi 0, %s117
    %s134 = sphi 0, %s118
  $region4: #{encoding_network_forward.1} parent=0 // loop_header_branch
    %13 = sbr.rel (%p11) target = $region8
  $region5: #{encoding_network_forward.1} parent=0 // loop_body
    %s15 = ssub.s32 %s10, 1
    %s16 = ssub.s32 %s10, 2
    %s17 = sadd.s32 %s10, 1
    %s18 = ssub.s32 %s10, %s17
    %p19 = scmp.eq.s32.totalorder %s18, 0
    %s21 = sadd.s32 %s20, 1
    %s22 = scalar_select %p19, %s20, %s21
    %p25 = pneg %p19
    %p26 = scmp.eq.s32.totalorder %s10, 1
    %p27 = por %p25, %p26
    %p28 = scmp.ne.s32.totalorder %s20, %s23
    %p29 = scmp.eq.s32.totalorder %s10, 0
    %p30 = por %p28, %p29
    %p31 = scmp.ne.s32.totalorder %s20, %s23
    %p32 = scmp.eq.s32.totalorder %s15, 1
    %p33 = por %p31, %p32
    %p34 = scmp.ne.s32.totalorder %s23, %s24
    %p35 = scmp.eq.s32.totalorder %s15, 0
    %p36 = por %p34, %p35
    %p37 = scmp.ne.s32.totalorder %s23, %s24
    %p38 = scmp.eq.s32.totalorder %s16, 1
    %p39 = por %p37, %p38
    %p41 = scmp.ne.s32.totalorder %s24, %s40
    %p42 = scmp.eq.s32.totalorder %s16, 0
    %p43 = por %p41, %p42
    %s45 = sadd.s32 %s44, 1
    %p48 = scmp.eq.s32.totalorder %s10, 1
    %p49 = scmp.ne.s32.totalorder %s44, %s46
    %p50 = scmp.eq.s32.totalorder %s10, 0
    %p51 = por %p49, %p50
    %p52 = scmp.ne.s32.totalorder %s44, %s46
    %p53 = scmp.eq.s32.totalorder %s15, 1
    %p54 = por %p52, %p53
    %p55 = scmp.ne.s32.totalorder %s46, %s47
    %p56 = scmp.eq.s32.totalorder %s15, 0
    %p57 = por %p55, %p56
    %p58 = scmp.ne.s32.totalorder %s46, %s47
    %p59 = scmp.eq.s32.totalorder %s16, 1
    %p60 = por %p58, %p59
    %p62 = scmp.ne.s32.totalorder %s47, %s61
    %p63 = scmp.eq.s32.totalorder %s16, 0
    %p64 = por %p62, %p63
    %s66 = sadd.s32 %s65, 1
    %p69 = scmp.eq.s32.totalorder %s10, 1
    %p70 = scmp.ne.s32.totalorder %s65, %s67
    %p71 = scmp.eq.s32.totalorder %s10, 0
    %p72 = por %p70, %p71
    %p73 = scmp.ne.s32.totalorder %s65, %s67
    %p74 = scmp.eq.s32.totalorder %s15, 1
    %p75 = por %p73, %p74
    %p76 = scmp.ne.s32.totalorder %s67, %s68
    %p77 = scmp.eq.s32.totalorder %s15, 0
    %p78 = por %p76, %p77
    %p79 = scmp.ne.s32.totalorder %s67, %s68
    %p80 = scmp.eq.s32.totalorder %s16, 1
    %p81 = por %p79, %p80
    %p83 = scmp.ne.s32.totalorder %s68, %s82
    %p84 = scmp.eq.s32.totalorder %s16, 0
    %p85 = por %p83, %p84
    %s86 = ssub.s32 %s10, %s17
    %p87 = scmp.eq.s32.totalorder %s86, 0
    %s89 = sadd.s32 %s88, 1
    %s90 = scalar_select %p87, %s88, %s89
    %p93 = pneg %p87
    %p94 = scmp.eq.s32.totalorder %s10, 1
    %p95 = por %p93, %p94
    %p96 = scmp.ne.s32.totalorder %s88, %s91
    %p97 = scmp.eq.s32.totalorder %s10, 0
    %p98 = por %p96, %p97
    %p99 = scmp.ne.s32.totalorder %s88, %s91
    %p100 = scmp.eq.s32.totalorder %s15, 1
    %p101 = por %p99, %p100
    %p102 = scmp.ne.s32.totalorder %s91, %s92
    %p103 = scmp.eq.s32.totalorder %s15, 0
    %p104 = por %p102, %p103
    %p105 = scmp.ne.s32.totalorder %s91, %s92
    %p106 = scmp.eq.s32.totalorder %s16, 1
    %p107 = por %p105, %p106
    %p109 = scmp.ne.s32.totalorder %s92, %s108
    %p110 = scmp.eq.s32.totalorder %s16, 0
    %p111 = por %p109, %p110
    %s112 = ssub.s32 %s10, %s17
    %p113 = scmp.eq.s32.totalorder %s112, 0
    %s115 = sadd.s32 %s114, 1
    %s116 = scalar_select %p113, %s114, %s115
    %p119 = pneg %p113
    %p120 = scmp.eq.s32.totalorder %s10, 1
    %p121 = por %p119, %p120
    %p122 = scmp.ne.s32.totalorder %s114, %s117
    %p123 = scmp.eq.s32.totalorder %s10, 0
    %p124 = por %p122, %p123
    %p125 = scmp.ne.s32.totalorder %s114, %s117
    %p126 = scmp.eq.s32.totalorder %s15, 1
    %p127 = por %p125, %p126
    %p128 = scmp.ne.s32.totalorder %s117, %s118
    %p129 = scmp.eq.s32.totalorder %s15, 0
    %p130 = por %p128, %p129
    %p131 = scmp.ne.s32.totalorder %s117, %s118
    %p132 = scmp.eq.s32.totalorder %s16, 1
    %p133 = por %p131, %p132
    %p135 = scmp.ne.s32.totalorder %s118, %s134
    %p136 = scmp.eq.s32.totalorder %s16, 0
    %p137 = por %p135, %p136
    %p138 = scmp.le.s32.totalorder 1, %s10
    %p139 = scmp.lt.s32.totalorder %s10, 3
    %p140 = pnand %p138, %p139
    %p141 = pneg %p140
    // Predicated region
    $region9: #{encoding_network_forward.1} parent=5 // pred_check
      _
    $region10: #{encoding_network_forward.1} parent=5 // pred_check_branch
      %143 = sbr.rel (%p140) target = $region12
    $region11: #{encoding_network_forward.1} parent=5 // pred_region
      %s144 = ssub.s32 %s10, 1
      // Predicated region
      $region13: #{encoding_network_forward.1} parent=11 // pred_check
        %p145 = pneg %p57
      $region14: #{encoding_network_forward.1} parent=11 // pred_check_branch
        %147 = sbr.rel (%p145) target = $region16
      $region15: #{encoding_network_forward.1} parent=11 // pred_region
        _
      $region16: #{encoding_network_forward.1} parent=11 // pred_fallthru
        _
      // Predicated region
      $region17: #{encoding_network_forward.1} parent=11 // pred_check
        %p148 = pneg %p78
      $region18: #{encoding_network_forward.1} parent=11 // pred_check_branch
        %150 = sbr.rel (%p148) target = $region20
      $region19: #{encoding_network_forward.1} parent=11 // pred_region
        _
      $region20: #{encoding_network_forward.1} parent=11 // pred_fallthru
        _
    $region12: #{encoding_network_forward.1} parent=5 // pred_fallthru
      _
    %p151 = scmp.lt.s32.totalorder %s10, 2
    // Predicated region
    $region21: #{encoding_network_forward.1} parent=5 // pred_check
      %p152 = pneg %p151
    $region22: #{encoding_network_forward.1} parent=5 // pred_check_branch
      %154 = sbr.rel (%p152) target = $region24
    $region23: #{encoding_network_forward.1} parent=5 // pred_region
      // Predicated region
      $region25: #{encoding_network_forward.1} parent=23 // pred_check
        %p155 = pneg %p30
      $region26: #{encoding_network_forward.1} parent=23 // pred_check_branch
        %157 = sbr.rel (%p155) target = $region28
      $region27: #{encoding_network_forward.1} parent=23 // pred_region
        %s158 = smul.u32 8, %s10
        %p159 = scmp.lt.s32.totalorder %s158, 15
        %s160 = scalar_select %p159, %s158, 15
        %s161 = smul.addr %s160, 8
        %s162 = scalar_lea.vmem %s0, %s161
        %s163 = smul.u32 8, %s10
      $region28: #{encoding_network_forward.1} parent=23 // pred_fallthru
        _
      // Predicated region
      $region29: #{encoding_network_forward.1} parent=23 // pred_check
        %p164 = pneg %p98
      $region30: #{encoding_network_forward.1} parent=23 // pred_check_branch
        %166 = sbr.rel (%p164) target = $region32
      $region31: #{encoding_network_forward.1} parent=23 // pred_region
        %s167 = smul.u32 4, %s10
        %p168 = scmp.lt.s32.totalorder %s167, 7
        %s169 = scalar_select %p168, %s167, 7
        %s170 = smul.addr %s169, 8
        %s171 = scalar_lea.vmem %s3, %s170
        %s172 = smul.u32 4, %s10
      $region32: #{encoding_network_forward.1} parent=23 // pred_fallthru
        _
    $region24: #{encoding_network_forward.1} parent=5 // pred_fallthru
      _
    %p173 = scmp.le.s32.totalorder 1, %s10
    %p174 = scmp.lt.s32.totalorder %s10, 3
    %p175 = pnand %p173, %p174
    %p176 = pneg %p175
    // Predicated region
    $region33: #{encoding_network_forward.1} parent=5 // pred_check
      _
    $region34: #{encoding_network_forward.1} parent=5 // pred_check_branch
      %178 = sbr.rel (%p175) target = $region36
    $region35: #{encoding_network_forward.1} parent=5 // pred_region
      %s179 = ssub.s32 %s10, 1
      %s180 = smul.u32 8, %s15
      %p181 = scmp.lt.s32.totalorder %s180, 15
      %s182 = scalar_select %p181, %s180, 15
      %s183 = smul.addr %s182, 8
      %s184 = scalar_lea.vmem %s0, %s183
      %p185 = pneg %p36
      %p186 = pneg %p33
      %p187 = pneg %p57
      %p188 = pneg %p54
      %p189 = pneg %p78
      %p190 = pneg %p75
      %s191 = smul.u32 4, %s15
      %p192 = scmp.lt.s32.totalorder %s191, 7
      %s193 = scalar_select %p192, %s191, 7
      %s194 = smul.addr %s193, 8
      %s195 = scalar_lea.vmem %s3, %s194
      %p196 = pneg %p104
      %p197 = pneg %p101
      %p198 = pneg %p130
      %p199 = pneg %p127
      %s200 = smul.u32 4, %s15
      %p201 = scmp.lt.s32.totalorder %s200, 7
      %s202 = scalar_select %p201, %s200, 7
      %s203 = smul.addr %s202, 8
      %s204 = scalar_lea.vmem %s4, %s203
      %s205 = smul.u32 8, %s15
      %p206 = scmp.lt.s32.totalorder %s205, 15
      %s207 = scalar_select %p206, %s205, 15
      %s208 = smul.addr %s207, 8
      %s209 = scalar_lea.vmem %s0, %s208
      %s210 = smul.u32 8, %s15
      %s211 = smul.u32 4, %s15
      %p212 = scmp.lt.s32.totalorder %s211, 7
      %s213 = scalar_select %p212, %s211, 7
      %s214 = smul.addr %s213, 8
      %s215 = scalar_lea.vmem %s3, %s214
      %s216 = smul.u32 4, %s15
      %s217 = smul.u32 4, %s15
      %p218 = scmp.lt.s32.totalorder %s217, 7
      %s219 = scalar_select %p218, %s217, 7
      %s220 = smul.addr %s219, 8
      %s221 = scalar_lea.vmem %s4, %s220
      %s222 = smul.u32 4, %s15
      %v223 = vld [vmem:[%s209] sm:$0xff]
      %v224 = vld [vmem:[%s209 + $0x8] sm:$0xff]
      %v225 = vld [vmem:[%s209 + $0x10] sm:$0xff]
      %v226 = vld [vmem:[%s209 + $0x18] sm:$0xff]
      %v227 = vld [vmem:[%s209 + $0x20] sm:$0xff]
      %v228 = vld [vmem:[%s209 + $0x28] sm:$0xff]
      %v229 = vld [vmem:[%s209 + $0x30] sm:$0xff]
      %v230 = vld [vmem:[%s209 + $0x38] sm:$0xff]
      %v231 = vld [vmem:[%s1] sm:$0xff]
      %v232 = vld [vmem:[%s1 + $0x8] sm:$0xff]
      %v233 = vld [vmem:[%s1 + $0x10] sm:$0xff]
      %v234 = vld [vmem:[%s1 + $0x18] sm:$0xff]
      %vm235 = vcmask 130048
      %v237 = vsel %vm235, %v223, 0
      %v240 = vsel %vm235, %v224, 0
      %v243 = vsel %vm235, %v225, 0
      %v246 = vsel %vm235, %v226, 0
      %v249 = vsel %vm235, %v227, 0
      %v252 = vsel %vm235, %v228, 0
      %v255 = vsel %vm235, %v229, 0
      %v258 = vsel %vm235, %v230, 0
      %260 = vmatprep.subr.mxu0 %v232
      %261 = vmatpush1.msra.mxu0 %v231
      %262 = vmatprep.subr.mxu0 %v234
      %263 = vmatpush1.msra.mxu0 %v233
      %264 = vmatprep.subr.mxu0 0.0
      %265 = vmatpush1.msra.mxu0 0.0
      %266 = vmatprep.subr.mxu0 0.0
      %267 = vmatpush1.msra.mxu0 0.0
      %268 = vmatprep.subr.mxu0 0.0
      %269 = vmatpush1.msra.mxu0 0.0
      %270 = vmatprep.subr.mxu0 0.0
      %271 = vmatpush1.msra.mxu0 0.0
      %272 = vmatprep.subr.mxu0 0.0
      %273 = vmatpush1.msra.mxu0 0.0
      %274 = vmatprep.subr.mxu0 0.0
      %275 = vmatpush1.msra.mxu0 0.0
      %276 = vmatprep.subr.mxu0 0.0
      %277 = vmatpush1.msra.mxu0 0.0
      %278 = vmatprep.subr.mxu0 0.0
      %279 = vmatpush1.msra.mxu0 0.0
      %280 = vmatprep.subr.mxu0 0.0
      %281 = vmatpush1.msra.mxu0 0.0
      %282 = vmatprep.subr.mxu0 0.0
      %283 = vmatpush1.msra.mxu0 0.0
      %284 = vmatprep.subr.mxu0 0.0
      %285 = vmatpush1.msra.mxu0 0.0
      %286 = vmatprep.subr.mxu0 0.0
      %287 = vmatpush1.msra.mxu0 0.0
      %288 = vmatprep.subr.mxu0 0.0
      %289 = vmatpush1.msra.mxu0 0.0
      %290 = vmatprep.subr.mxu0 0.0
      %291 = vmatpush1.msra.mxu0 0.0
      %292 = vmatprep.subr.mxu0 0.0
      %293 = vmatpush1.msra.mxu0 0.0
      %294 = vmatprep.subr.mxu0 0.0
      %295 = vmatpush1.msra.mxu0 0.0
      %296 = vmatprep.subr.mxu0 0.0
      %297 = vmatpush1.msra.mxu0 0.0
      %298 = vmatprep.subr.mxu0 0.0
      %299 = vmatpush1.msra.mxu0 0.0
      %300 = vmatprep.subr.mxu0 0.0
      %301 = vmatpush1.msra.mxu0 0.0
      %302 = vmatprep.subr.mxu0 0.0
      %303 = vmatpush1.msra.mxu0 0.0
      %304 = vmatprep.subr.mxu0 0.0
      %305 = vmatpush1.msra.mxu0 0.0
      %306 = vmatprep.subr.mxu0 0.0
      %307 = vmatpush1.msra.mxu0 0.0
      %308 = vmatprep.subr.mxu0 0.0
      %309 = vmatpush1.msra.mxu0 0.0
      %310 = vmatprep.subr.mxu0 0.0
      %311 = vmatpush1.msra.mxu0 0.0
      %312 = vmatprep.subr.mxu0 0.0
      %313 = vmatpush1.msra.mxu0 0.0
      %314 = vmatprep.subr.mxu0 0.0
      %315 = vmatpush1.msra.mxu0 0.0
      %316 = vmatprep.subr.mxu0 0.0
      %317 = vmatpush1.msra.mxu0 0.0
      %318 = vmatprep.subr.mxu0 0.0
      %319 = vmatpush1.msra.mxu0 0.0
      %320 = vmatprep.subr.mxu0 0.0
      %321 = vmatpush1.msra.mxu0 0.0
      %322 = vmatprep.subr.mxu0 0.0
      %323 = vmatpush1.msra.mxu0 0.0
      %324 = vmatprep.mubr.f32.mxu0 0.0
      %325 = vmatmul.mubr.f32.gmra.mrb[0].mxu0 %v237
      %v326 = vpop.f32.mrb[0].mxu0
      %v327 = vadd.f32 0.0, %v326
      %v328 = vpop.f32.mrb[0].mxu0
      %v329 = vadd.f32 0.0, %v328
      %330 = vmatprep.mubr.f32.mxu0 0.0
      %331 = vmatmul.mubr.f32.gmra.mrb[0].mxu0 %v240
      %v332 = vpop.f32.mrb[0].mxu0
      %v333 = vadd.f32 0.0, %v332
      %v334 = vpop.f32.mrb[0].mxu0
      %v335 = vadd.f32 0.0, %v334
      %336 = vmatprep.mubr.f32.mxu0 0.0
      %337 = vmatmul.mubr.f32.gmra.mrb[0].mxu0 %v243
      %v338 = vpop.f32.mrb[0].mxu0
      %v339 = vadd.f32 0.0, %v338
      %v340 = vpop.f32.mrb[0].mxu0
      %v341 = vadd.f32 0.0, %v340
      %342 = vmatprep.mubr.f32.mxu0 0.0
      %343 = vmatmul.mubr.f32.gmra.mrb[0].mxu0 %v246
      %v344 = vpop.f32.mrb[0].mxu0
      %v345 = vadd.f32 0.0, %v344
      %v346 = vpop.f32.mrb[0].mxu0
      %v347 = vadd.f32 0.0, %v346
      %348 = vmatprep.mubr.f32.mxu0 0.0
      %349 = vmatmul.mubr.f32.gmra.mrb[0].mxu0 %v249
      %v350 = vpop.f32.mrb[0].mxu0
      %v351 = vadd.f32 0.0, %v350
      %v352 = vpop.f32.mrb[0].mxu0
      %v353 = vadd.f32 0.0, %v352
      %354 = vmatprep.mubr.f32.mxu0 0.0
      %355 = vmatmul.mubr.f32.gmra.mrb[0].mxu0 %v252
      %v356 = vpop.f32.mrb[0].mxu0
      %v357 = vadd.f32 0.0, %v356
      %v358 = vpop.f32.mrb[0].mxu0
      %v359 = vadd.f32 0.0, %v358
      %360 = vmatprep.mubr.f32.mxu0 0.0
      %361 = vmatmul.mubr.f32.gmra.mrb[0].mxu0 %v255
      %v362 = vpop.f32.mrb[0].mxu0
      %v363 = vadd.f32 0.0, %v362
      %v364 = vpop.f32.mrb[0].mxu0
      %v365 = vadd.f32 0.0, %v364
      %366 = vmatprep.mubr.f32.mxu0 0.0
      %367 = vmatmul.mubr.f32.gmra.mrb[0].mxu0 %v258
      %v368 = vpop.f32.mrb[0].mxu0
      %v369 = vadd.f32 0.0, %v368
      %v370 = vpop.f32.mrb[0].mxu0
      %v371 = vadd.f32 0.0, %v370
      %372 = vdwg.mxu0
      %v381 = vcombine.high %v327, %v327
      %v383 = vunpack.c.l.s4 1966171168
      %v384 = vunpack.c.0.s8 %v383
      %v385 = vlaneseq
      %v386 = vshrl.u32 %v385, 7
      %v387 = vsub.s32 %v384, %v386
      %v388 = vrot.slane %v327, %v387
      %v390 = vunpack.c.l.s4 1966171168
      %v391 = vunpack.c.0.s8 %v390
      %v392 = vlaneseq
      %v393 = vshrl.u32 %v392, 7
      %v394 = vsub.s32 %v391, %v393
      %v395 = vrot.slane %v381, %v394
      %v396 = vcombine.high %v388, %v388
      %v397 = vcombine.high %v395, %v395
      %v399 = vunpack.c.l.s4 1966171168
      %v400 = vunpack.c.0.s8 %v399
      %v401 = vlaneseq
      %v402 = vshrl.u32 %v401, 7
      %v403 = vsub.s32 %v400, %v402
      %v404 = vrot.slane %v388, %v403
      %v406 = vunpack.c.l.s4 1966171168
      %v407 = vunpack.c.0.s8 %v406
      %v408 = vlaneseq
      %v409 = vshrl.u32 %v408, 7
      %v410 = vsub.s32 %v407, %v409
      %v411 = vrot.slane %v395, %v410
      %v413 = vunpack.c.l.s4 1966171168
      %v414 = vunpack.c.0.s8 %v413
      %v415 = vlaneseq
      %v416 = vshrl.u32 %v415, 7
      %v417 = vsub.s32 %v414, %v416
      %v418 = vrot.slane %v396, %v417
      %v420 = vunpack.c.l.s4 1966171168
      %v421 = vunpack.c.0.s8 %v420
      %v422 = vlaneseq
      %v423 = vshrl.u32 %v422, 7
      %v424 = vsub.s32 %v421, %v423
      %v425 = vrot.slane %v397, %v424
      %v426 = vcombine.high %v404, %v404
      %v427 = vcombine.high %v411, %v411
      %v428 = vcombine.high %v418, %v418
      %v429 = vcombine.high %v425, %v425
      %v430 = vcombine.high %v333, %v333
      %v432 = vunpack.c.l.s4 1966171168
      %v433 = vunpack.c.0.s8 %v432
      %v434 = vlaneseq
      %v435 = vshrl.u32 %v434, 7
      %v436 = vsub.s32 %v433, %v435
      %v437 = vrot.slane %v333, %v436
      %v439 = vunpack.c.l.s4 1966171168
      %v440 = vunpack.c.0.s8 %v439
      %v441 = vlaneseq
      %v442 = vshrl.u32 %v441, 7
      %v443 = vsub.s32 %v440, %v442
      %v444 = vrot.slane %v430, %v443
      %v445 = vcombine.high %v437, %v437
      %v446 = vcombine.high %v444, %v444
      %v448 = vunpack.c.l.s4 1966171168
      %v449 = vunpack.c.0.s8 %v448
      %v450 = vlaneseq
      %v451 = vshrl.u32 %v450, 7
      %v452 = vsub.s32 %v449, %v451
      %v453 = vrot.slane %v437, %v452
      %v455 = vunpack.c.l.s4 1966171168
      %v456 = vunpack.c.0.s8 %v455
      %v457 = vlaneseq
      %v458 = vshrl.u32 %v457, 7
      %v459 = vsub.s32 %v456, %v458
      %v460 = vrot.slane %v444, %v459
      %v462 = vunpack.c.l.s4 1966171168
      %v463 = vunpack.c.0.s8 %v462
      %v464 = vlaneseq
      %v465 = vshrl.u32 %v464, 7
      %v466 = vsub.s32 %v463, %v465
      %v467 = vrot.slane %v445, %v466
      %v469 = vunpack.c.l.s4 1966171168
      %v470 = vunpack.c.0.s8 %v469
      %v471 = vlaneseq
      %v472 = vshrl.u32 %v471, 7
      %v473 = vsub.s32 %v470, %v472
      %v474 = vrot.slane %v446, %v473
      %v475 = vcombine.high %v453, %v453
      %v476 = vcombine.high %v460, %v460
      %v477 = vcombine.high %v467, %v467
      %v478 = vcombine.high %v474, %v474
      %v479 = vcombine.high %v339, %v339
      %v481 = vunpack.c.l.s4 1966171168
      %v482 = vunpack.c.0.s8 %v481
      %v483 = vlaneseq
      %v484 = vshrl.u32 %v483, 7
      %v485 = vsub.s32 %v482, %v484
      %v486 = vrot.slane %v339, %v485
      %v488 = vunpack.c.l.s4 1966171168
      %v489 = vunpack.c.0.s8 %v488
      %v490 = vlaneseq
      %v491 = vshrl.u32 %v490, 7
      %v492 = vsub.s32 %v489, %v491
      %v493 = vrot.slane %v479, %v492
      %v494 = vcombine.high %v486, %v486
      %v495 = vcombine.high %v493, %v493
      %v497 = vunpack.c.l.s4 1966171168
      %v498 = vunpack.c.0.s8 %v497
      %v499 = vlaneseq
      %v500 = vshrl.u32 %v499, 7
      %v501 = vsub.s32 %v498, %v500
      %v502 = vrot.slane %v486, %v501
      %v504 = vunpack.c.l.s4 1966171168
      %v505 = vunpack.c.0.s8 %v504
      %v506 = vlaneseq
      %v507 = vshrl.u32 %v506, 7
      %v508 = vsub.s32 %v505, %v507
      %v509 = vrot.slane %v493, %v508
      %v511 = vunpack.c.l.s4 1966171168
      %v512 = vunpack.c.0.s8 %v511
      %v513 = vlaneseq
      %v514 = vshrl.u32 %v513, 7
      %v515 = vsub.s32 %v512, %v514
      %v516 = vrot.slane %v494, %v515
      %v518 = vunpack.c.l.s4 1966171168
      %v519 = vunpack.c.0.s8 %v518
      %v520 = vlaneseq
      %v521 = vshrl.u32 %v520, 7
      %v522 = vsub.s32 %v519, %v521
      %v523 = vrot.slane %v495, %v522
      %v524 = vcombine.high %v502, %v502
      %v525 = vcombine.high %v509, %v509
      %v526 = vcombine.high %v516, %v516
      %v527 = vcombine.high %v523, %v523
      %v528 = vcombine.high %v345, %v345
      %v530 = vunpack.c.l.s4 1966171168
      %v531 = vunpack.c.0.s8 %v530
      %v532 = vlaneseq
      %v533 = vshrl.u32 %v532, 7
      %v534 = vsub.s32 %v531, %v533
      %v535 = vrot.slane %v345, %v534
      %v537 = vunpack.c.l.s4 1966171168
      %v538 = vunpack.c.0.s8 %v537
      %v539 = vlaneseq
      %v540 = vshrl.u32 %v539, 7
      %v541 = vsub.s32 %v538, %v540
      %v542 = vrot.slane %v528, %v541
      %v543 = vcombine.high %v535, %v535
      %v544 = vcombine.high %v542, %v542
      %v546 = vunpack.c.l.s4 1966171168
      %v547 = vunpack.c.0.s8 %v546
      %v548 = vlaneseq
      %v549 = vshrl.u32 %v548, 7
      %v550 = vsub.s32 %v547, %v549
      %v551 = vrot.slane %v535, %v550
      %v553 = vunpack.c.l.s4 1966171168
      %v554 = vunpack.c.0.s8 %v553
      %v555 = vlaneseq
      %v556 = vshrl.u32 %v555, 7
      %v557 = vsub.s32 %v554, %v556
      %v558 = vrot.slane %v542, %v557
      %v560 = vunpack.c.l.s4 1966171168
      %v561 = vunpack.c.0.s8 %v560
      %v562 = vlaneseq
      %v563 = vshrl.u32 %v562, 7
      %v564 = vsub.s32 %v561, %v563
      %v565 = vrot.slane %v543, %v564
      %v567 = vunpack.c.l.s4 1966171168
      %v568 = vunpack.c.0.s8 %v567
      %v569 = vlaneseq
      %v570 = vshrl.u32 %v569, 7
      %v571 = vsub.s32 %v568, %v570
      %v572 = vrot.slane %v544, %v571
      %v573 = vcombine.high %v551, %v551
      %v574 = vcombine.high %v558, %v558
      %v575 = vcombine.high %v565, %v565
      %v576 = vcombine.high %v572, %v572
      %v577 = vcombine.high %v351, %v351
      %v579 = vunpack.c.l.s4 1966171168
      %v580 = vunpack.c.0.s8 %v579
      %v581 = vlaneseq
      %v582 = vshrl.u32 %v581, 7
      %v583 = vsub.s32 %v580, %v582
      %v584 = vrot.slane %v351, %v583
      %v586 = vunpack.c.l.s4 1966171168
      %v587 = vunpack.c.0.s8 %v586
      %v588 = vlaneseq
      %v589 = vshrl.u32 %v588, 7
      %v590 = vsub.s32 %v587, %v589
      %v591 = vrot.slane %v577, %v590
      %v592 = vcombine.high %v584, %v584
      %v593 = vcombine.high %v591, %v591
      %v595 = vunpack.c.l.s4 1966171168
      %v596 = vunpack.c.0.s8 %v595
      %v597 = vlaneseq
      %v598 = vshrl.u32 %v597, 7
      %v599 = vsub.s32 %v596, %v598
      %v600 = vrot.slane %v584, %v599
      %v602 = vunpack.c.l.s4 1966171168
      %v603 = vunpack.c.0.s8 %v602
      %v604 = vlaneseq
      %v605 = vshrl.u32 %v604, 7
      %v606 = vsub.s32 %v603, %v605
      %v607 = vrot.slane %v591, %v606
      %v609 = vunpack.c.l.s4 1966171168
      %v610 = vunpack.c.0.s8 %v609
      %v611 = vlaneseq
      %v612 = vshrl.u32 %v611, 7
      %v613 = vsub.s32 %v610, %v612
      %v614 = vrot.slane %v592, %v613
      %v616 = vunpack.c.l.s4 1966171168
      %v617 = vunpack.c.0.s8 %v616
      %v618 = vlaneseq
      %v619 = vshrl.u32 %v618, 7
      %v620 = vsub.s32 %v617, %v619
      %v621 = vrot.slane %v593, %v620
      %v622 = vcombine.high %v600, %v600
      %v623 = vcombine.high %v607, %v607
      %v624 = vcombine.high %v614, %v614
      %v625 = vcombine.high %v621, %v621
      %v626 = vcombine.high %v357, %v357
      %v628 = vunpack.c.l.s4 1966171168
      %v629 = vunpack.c.0.s8 %v628
      %v630 = vlaneseq
      %v631 = vshrl.u32 %v630, 7
      %v632 = vsub.s32 %v629, %v631
      %v633 = vrot.slane %v357, %v632
      %v635 = vunpack.c.l.s4 1966171168
      %v636 = vunpack.c.0.s8 %v635
      %v637 = vlaneseq
      %v638 = vshrl.u32 %v637, 7
      %v639 = vsub.s32 %v636, %v638
      %v640 = vrot.slane %v626, %v639
      %v641 = vcombine.high %v633, %v633
      %v642 = vcombine.high %v640, %v640
      %v644 = vunpack.c.l.s4 1966171168
      %v645 = vunpack.c.0.s8 %v644
      %v646 = vlaneseq
      %v647 = vshrl.u32 %v646, 7
      %v648 = vsub.s32 %v645, %v647
      %v649 = vrot.slane %v633, %v648
      %v651 = vunpack.c.l.s4 1966171168
      %v652 = vunpack.c.0.s8 %v651
      %v653 = vlaneseq
      %v654 = vshrl.u32 %v653, 7
      %v655 = vsub.s32 %v652, %v654
      %v656 = vrot.slane %v640, %v655
      %v658 = vunpack.c.l.s4 1966171168
      %v659 = vunpack.c.0.s8 %v658
      %v660 = vlaneseq
      %v661 = vshrl.u32 %v660, 7
      %v662 = vsub.s32 %v659, %v661
      %v663 = vrot.slane %v641, %v662
      %v665 = vunpack.c.l.s4 1966171168
      %v666 = vunpack.c.0.s8 %v665
      %v667 = vlaneseq
      %v668 = vshrl.u32 %v667, 7
      %v669 = vsub.s32 %v666, %v668
      %v670 = vrot.slane %v642, %v669
      %v671 = vcombine.high %v649, %v649
      %v672 = vcombine.high %v656, %v656
      %v673 = vcombine.high %v663, %v663
      %v674 = vcombine.high %v670, %v670
      %v675 = vcombine.high %v363, %v363
      %v677 = vunpack.c.l.s4 1966171168
      %v678 = vunpack.c.0.s8 %v677
      %v679 = vlaneseq
      %v680 = vshrl.u32 %v679, 7
      %v681 = vsub.s32 %v678, %v680
      %v682 = vrot.slane %v363, %v681
      %v684 = vunpack.c.l.s4 1966171168
      %v685 = vunpack.c.0.s8 %v684
      %v686 = vlaneseq
      %v687 = vshrl.u32 %v686, 7
      %v688 = vsub.s32 %v685, %v687
      %v689 = vrot.slane %v675, %v688
      %v690 = vcombine.high %v682, %v682
      %v691 = vcombine.high %v689, %v689
      %v693 = vunpack.c.l.s4 1966171168
      %v694 = vunpack.c.0.s8 %v693
      %v695 = vlaneseq
      %v696 = vshrl.u32 %v695, 7
      %v697 = vsub.s32 %v694, %v696
      %v698 = vrot.slane %v682, %v697
      %v700 = vunpack.c.l.s4 1966171168
      %v701 = vunpack.c.0.s8 %v700
      %v702 = vlaneseq
      %v703 = vshrl.u32 %v702, 7
      %v704 = vsub.s32 %v701, %v703
      %v705 = vrot.slane %v689, %v704
      %v707 = vunpack.c.l.s4 1966171168
      %v708 = vunpack.c.0.s8 %v707
      %v709 = vlaneseq
      %v710 = vshrl.u32 %v709, 7
      %v711 = vsub.s32 %v708, %v710
      %v712 = vrot.slane %v690, %v711
      %v714 = vunpack.c.l.s4 1966171168
      %v715 = vunpack.c.0.s8 %v714
      %v716 = vlaneseq
      %v717 = vshrl.u32 %v716, 7
      %v718 = vsub.s32 %v715, %v717
      %v719 = vrot.slane %v691, %v718
      %v720 = vcombine.high %v698, %v698
      %v721 = vcombine.high %v705, %v705
      %v722 = vcombine.high %v712, %v712
      %v723 = vcombine.high %v719, %v719
      %v724 = vcombine.high %v369, %v369
      %v726 = vunpack.c.l.s4 1966171168
      %v727 = vunpack.c.0.s8 %v726
      %v728 = vlaneseq
      %v729 = vshrl.u32 %v728, 7
      %v730 = vsub.s32 %v727, %v729
      %v731 = vrot.slane %v369, %v730
      %v733 = vunpack.c.l.s4 1966171168
      %v734 = vunpack.c.0.s8 %v733
      %v735 = vlaneseq
      %v736 = vshrl.u32 %v735, 7
      %v737 = vsub.s32 %v734, %v736
      %v738 = vrot.slane %v724, %v737
      %v739 = vcombine.high %v731, %v731
      %v740 = vcombine.high %v738, %v738
      %v742 = vunpack.c.l.s4 1966171168
      %v743 = vunpack.c.0.s8 %v742
      %v744 = vlaneseq
      %v745 = vshrl.u32 %v744, 7
      %v746 = vsub.s32 %v743, %v745
      %v747 = vrot.slane %v731, %v746
      %v749 = vunpack.c.l.s4 1966171168
      %v750 = vunpack.c.0.s8 %v749
      %v751 = vlaneseq
      %v752 = vshrl.u32 %v751, 7
      %v753 = vsub.s32 %v750, %v752
      %v754 = vrot.slane %v738, %v753
      %v756 = vunpack.c.l.s4 1966171168
      %v757 = vunpack.c.0.s8 %v756
      %v758 = vlaneseq
      %v759 = vshrl.u32 %v758, 7
      %v760 = vsub.s32 %v757, %v759
      %v761 = vrot.slane %v739, %v760
      %v763 = vunpack.c.l.s4 1966171168
      %v764 = vunpack.c.0.s8 %v763
      %v765 = vlaneseq
      %v766 = vshrl.u32 %v765, 7
      %v767 = vsub.s32 %v764, %v766
      %v768 = vrot.slane %v740, %v767
      %v769 = vcombine.high %v747, %v747
      %v770 = vcombine.high %v754, %v754
      %v771 = vcombine.high %v761, %v761
      %v772 = vcombine.high %v768, %v768
      %v773 = vlaneseq
      %v774 = vshrl.u32 %v773, 7
      %v775 = vsub.s32 0, %v774
      %v776 = vrot.slane %v404, %v775
      %v777 = vlaneseq
      %v778 = vshrl.u32 %v777, 7
      %v779 = vsub.s32 0, %v778
      %v780 = vrot.slane %v418, %v779
      %v781 = vlaneseq
      %v782 = vshrl.u32 %v781, 7
      %v783 = vsub.s32 0, %v782
      %v784 = vrot.slane %v426, %v783
      %v785 = vlaneseq
      %v786 = vshrl.u32 %v785, 7
      %v787 = vsub.s32 0, %v786
      %v788 = vrot.slane %v428, %v787
      %v789 = vlaneseq
      %v790 = vshrl.u32 %v789, 7
      %v791 = vsub.s32 0, %v790
      %v792 = vrot.slane %v411, %v791
      %v793 = vlaneseq
      %v794 = vshrl.u32 %v793, 7
      %v795 = vsub.s32 0, %v794
      %v796 = vrot.slane %v425, %v795
      %v797 = vlaneseq
      %v798 = vshrl.u32 %v797, 7
      %v799 = vsub.s32 0, %v798
      %v800 = vrot.slane %v427, %v799
      %v801 = vlaneseq
      %v802 = vshrl.u32 %v801, 7
      %v803 = vsub.s32 0, %v802
      %v804 = vrot.slane %v429, %v803
      %v805 = vlaneseq
      %v806 = vshrl.u32 %v805, 7
      %v807 = vsub.s32 0, %v806
      %v808 = vrot.slane %v453, %v807
      %v809 = vlaneseq
      %v810 = vshrl.u32 %v809, 7
      %v811 = vsub.s32 0, %v810
      %v812 = vrot.slane %v467, %v811
      %v813 = vlaneseq
      %v814 = vshrl.u32 %v813, 7
      %v815 = vsub.s32 0, %v814
      %v816 = vrot.slane %v475, %v815
      %v817 = vlaneseq
      %v818 = vshrl.u32 %v817, 7
      %v819 = vsub.s32 0, %v818
      %v820 = vrot.slane %v477, %v819
      %v821 = vlaneseq
      %v822 = vshrl.u32 %v821, 7
      %v823 = vsub.s32 0, %v822
      %v824 = vrot.slane %v460, %v823
      %v825 = vlaneseq
      %v826 = vshrl.u32 %v825, 7
      %v827 = vsub.s32 0, %v826
      %v828 = vrot.slane %v474, %v827
      %v829 = vlaneseq
      %v830 = vshrl.u32 %v829, 7
      %v831 = vsub.s32 0, %v830
      %v832 = vrot.slane %v476, %v831
      %v833 = vlaneseq
      %v834 = vshrl.u32 %v833, 7
      %v835 = vsub.s32 0, %v834
      %v836 = vrot.slane %v478, %v835
      %v837 = vlaneseq
      %v838 = vshrl.u32 %v837, 7
      %v839 = vsub.s32 0, %v838
      %v840 = vrot.slane %v502, %v839
      %v841 = vlaneseq
      %v842 = vshrl.u32 %v841, 7
      %v843 = vsub.s32 0, %v842
      %v844 = vrot.slane %v516, %v843
      %v845 = vlaneseq
      %v846 = vshrl.u32 %v845, 7
      %v847 = vsub.s32 0, %v846
      %v848 = vrot.slane %v524, %v847
      %v849 = vlaneseq
      %v850 = vshrl.u32 %v849, 7
      %v851 = vsub.s32 0, %v850
      %v852 = vrot.slane %v526, %v851
      %v853 = vlaneseq
      %v854 = vshrl.u32 %v853, 7
      %v855 = vsub.s32 0, %v854
      %v856 = vrot.slane %v509, %v855
      %v857 = vlaneseq
      %v858 = vshrl.u32 %v857, 7
      %v859 = vsub.s32 0, %v858
      %v860 = vrot.slane %v523, %v859
      %v861 = vlaneseq
      %v862 = vshrl.u32 %v861, 7
      %v863 = vsub.s32 0, %v862
      %v864 = vrot.slane %v525, %v863
      %v865 = vlaneseq
      %v866 = vshrl.u32 %v865, 7
      %v867 = vsub.s32 0, %v866
      %v868 = vrot.slane %v527, %v867
      %v869 = vlaneseq
      %v870 = vshrl.u32 %v869, 7
      %v871 = vsub.s32 0, %v870
      %v872 = vrot.slane %v551, %v871
      %v873 = vlaneseq
      %v874 = vshrl.u32 %v873, 7
      %v875 = vsub.s32 0, %v874
      %v876 = vrot.slane %v565, %v875
      %v877 = vlaneseq
      %v878 = vshrl.u32 %v877, 7
      %v879 = vsub.s32 0, %v878
      %v880 = vrot.slane %v573, %v879
      %v881 = vlaneseq
      %v882 = vshrl.u32 %v881, 7
      %v883 = vsub.s32 0, %v882
      %v884 = vrot.slane %v575, %v883
      %v885 = vlaneseq
      %v886 = vshrl.u32 %v885, 7
      %v887 = vsub.s32 0, %v886
      %v888 = vrot.slane %v558, %v887
      %v889 = vlaneseq
      %v890 = vshrl.u32 %v889, 7
      %v891 = vsub.s32 0, %v890
      %v892 = vrot.slane %v572, %v891
      %v893 = vlaneseq
      %v894 = vshrl.u32 %v893, 7
      %v895 = vsub.s32 0, %v894
      %v896 = vrot.slane %v574, %v895
      %v897 = vlaneseq
      %v898 = vshrl.u32 %v897, 7
      %v899 = vsub.s32 0, %v898
      %v900 = vrot.slane %v576, %v899
      %v901 = vlaneseq
      %v902 = vshrl.u32 %v901, 7
      %v903 = vsub.s32 0, %v902
      %v904 = vrot.slane %v600, %v903
      %v905 = vlaneseq
      %v906 = vshrl.u32 %v905, 7
      %v907 = vsub.s32 0, %v906
      %v908 = vrot.slane %v614, %v907
      %v909 = vlaneseq
      %v910 = vshrl.u32 %v909, 7
      %v911 = vsub.s32 0, %v910
      %v912 = vrot.slane %v622, %v911
      %v913 = vlaneseq
      %v914 = vshrl.u32 %v913, 7
      %v915 = vsub.s32 0, %v914
      %v916 = vrot.slane %v624, %v915
      %v917 = vlaneseq
      %v918 = vshrl.u32 %v917, 7
      %v919 = vsub.s32 0, %v918
      %v920 = vrot.slane %v607, %v919
      %v921 = vlaneseq
      %v922 = vshrl.u32 %v921, 7
      %v923 = vsub.s32 0, %v922
      %v924 = vrot.slane %v621, %v923
      %v925 = vlaneseq
      %v926 = vshrl.u32 %v925, 7
      %v927 = vsub.s32 0, %v926
      %v928 = vrot.slane %v623, %v927
      %v929 = vlaneseq
      %v930 = vshrl.u32 %v929, 7
      %v931 = vsub.s32 0, %v930
      %v932 = vrot.slane %v625, %v931
      %v933 = vlaneseq
      %v934 = vshrl.u32 %v933, 7
      %v935 = vsub.s32 0, %v934
      %v936 = vrot.slane %v649, %v935
      %v937 = vlaneseq
      %v938 = vshrl.u32 %v937, 7
      %v939 = vsub.s32 0, %v938
      %v940 = vrot.slane %v663, %v939
      %v941 = vlaneseq
      %v942 = vshrl.u32 %v941, 7
      %v943 = vsub.s32 0, %v942
      %v944 = vrot.slane %v671, %v943
      %v945 = vlaneseq
      %v946 = vshrl.u32 %v945, 7
      %v947 = vsub.s32 0, %v946
      %v948 = vrot.slane %v673, %v947
      %v949 = vlaneseq
      %v950 = vshrl.u32 %v949, 7
      %v951 = vsub.s32 0, %v950
      %v952 = vrot.slane %v656, %v951
      %v953 = vlaneseq
      %v954 = vshrl.u32 %v953, 7
      %v955 = vsub.s32 0, %v954
      %v956 = vrot.slane %v670, %v955
      %v957 = vlaneseq
      %v958 = vshrl.u32 %v957, 7
      %v959 = vsub.s32 0, %v958
      %v960 = vrot.slane %v672, %v959
      %v961 = vlaneseq
      %v962 = vshrl.u32 %v961, 7
      %v963 = vsub.s32 0, %v962
      %v964 = vrot.slane %v674, %v963
      %v965 = vlaneseq
      %v966 = vshrl.u32 %v965, 7
      %v967 = vsub.s32 0, %v966
      %v968 = vrot.slane %v698, %v967
      %v969 = vlaneseq
      %v970 = vshrl.u32 %v969, 7
      %v971 = vsub.s32 0, %v970
      %v972 = vrot.slane %v712, %v971
      %v973 = vlaneseq
      %v974 = vshrl.u32 %v973, 7
      %v975 = vsub.s32 0, %v974
      %v976 = vrot.slane %v720, %v975
      %v977 = vlaneseq
      %v978 = vshrl.u32 %v977, 7
      %v979 = vsub.s32 0, %v978
      %v980 = vrot.slane %v722, %v979
      %v981 = vlaneseq
      %v982 = vshrl.u32 %v981, 7
      %v983 = vsub.s32 0, %v982
      %v984 = vrot.slane %v705, %v983
      %v985 = vlaneseq
      %v986 = vshrl.u32 %v985, 7
      %v987 = vsub.s32 0, %v986
      %v988 = vrot.slane %v719, %v987
      %v989 = vlaneseq
      %v990 = vshrl.u32 %v989, 7
      %v991 = vsub.s32 0, %v990
      %v992 = vrot.slane %v721, %v991
      %v993 = vlaneseq
      %v994 = vshrl.u32 %v993, 7
      %v995 = vsub.s32 0, %v994
      %v996 = vrot.slane %v723, %v995
      %v997 = vlaneseq
      %v998 = vshrl.u32 %v997, 7
      %v999 = vsub.s32 0, %v998
      %v1000 = vrot.slane %v747, %v999
      %v1001 = vlaneseq
      %v1002 = vshrl.u32 %v1001, 7
      %v1003 = vsub.s32 0, %v1002
      %v1004 = vrot.slane %v761, %v1003
      %v1005 = vlaneseq
      %v1006 = vshrl.u32 %v1005, 7
      %v1007 = vsub.s32 0, %v1006
      %v1008 = vrot.slane %v769, %v1007
      %v1009 = vlaneseq
      %v1010 = vshrl.u32 %v1009, 7
      %v1011 = vsub.s32 0, %v1010
      %v1012 = vrot.slane %v771, %v1011
      %v1013 = vlaneseq
      %v1014 = vshrl.u32 %v1013, 7
      %v1015 = vsub.s32 0, %v1014
      %v1016 = vrot.slane %v754, %v1015
      %v1017 = vlaneseq
      %v1018 = vshrl.u32 %v1017, 7
      %v1019 = vsub.s32 0, %v1018
      %v1020 = vrot.slane %v768, %v1019
      %v1021 = vlaneseq
      %v1022 = vshrl.u32 %v1021, 7
      %v1023 = vsub.s32 0, %v1022
      %v1024 = vrot.slane %v770, %v1023
      %v1025 = vlaneseq
      %v1026 = vshrl.u32 %v1025, 7
      %v1027 = vsub.s32 0, %v1026
      %v1028 = vrot.slane %v772, %v1027
      %v1093 = vadd.f32 %v776, %v329
      %v1094 = vadd.f32 %v780, %v329
      %v1095 = vadd.f32 %v784, %v329
      %v1096 = vadd.f32 %v788, %v329
      %v1097 = vadd.f32 %v792, %v329
      %v1098 = vadd.f32 %v796, %v329
      %v1099 = vadd.f32 %v800, %v329
      %v1100 = vadd.f32 %v804, %v329
      %v1101 = vadd.f32 %v808, %v335
      %v1102 = vadd.f32 %v812, %v335
      %v1103 = vadd.f32 %v816, %v335
      %v1104 = vadd.f32 %v820, %v335
      %v1105 = vadd.f32 %v824, %v335
      %v1106 = vadd.f32 %v828, %v335
      %v1107 = vadd.f32 %v832, %v335
      %v1108 = vadd.f32 %v836, %v335
      %v1109 = vadd.f32 %v840, %v341
      %v1110 = vadd.f32 %v844, %v341
      %v1111 = vadd.f32 %v848, %v341
      %v1112 = vadd.f32 %v852, %v341
      %v1113 = vadd.f32 %v856, %v341
      %v1114 = vadd.f32 %v860, %v341
      %v1115 = vadd.f32 %v864, %v341
      %v1116 = vadd.f32 %v868, %v341
      %v1117 = vadd.f32 %v872, %v347
      %v1118 = vadd.f32 %v876, %v347
      %v1119 = vadd.f32 %v880, %v347
      %v1120 = vadd.f32 %v884, %v347
      %v1121 = vadd.f32 %v888, %v347
      %v1122 = vadd.f32 %v892, %v347
      %v1123 = vadd.f32 %v896, %v347
      %v1124 = vadd.f32 %v900, %v347
      %v1125 = vadd.f32 %v904, %v353
      %v1126 = vadd.f32 %v908, %v353
      %v1127 = vadd.f32 %v912, %v353
      %v1128 = vadd.f32 %v916, %v353
      %v1129 = vadd.f32 %v920, %v353
      %v1130 = vadd.f32 %v924, %v353
      %v1131 = vadd.f32 %v928, %v353
      %v1132 = vadd.f32 %v932, %v353
      %v1133 = vadd.f32 %v936, %v359
      %v1134 = vadd.f32 %v940, %v359
      %v1135 = vadd.f32 %v944, %v359
      %v1136 = vadd.f32 %v948, %v359
      %v1137 = vadd.f32 %v952, %v359
      %v1138 = vadd.f32 %v956, %v359
      %v1139 = vadd.f32 %v960, %v359
      %v1140 = vadd.f32 %v964, %v359
      %v1141 = vadd.f32 %v968, %v365
      %v1142 = vadd.f32 %v972, %v365
      %v1143 = vadd.f32 %v976, %v365
      %v1144 = vadd.f32 %v980, %v365
      %v1145 = vadd.f32 %v984, %v365
      %v1146 = vadd.f32 %v988, %v365
      %v1147 = vadd.f32 %v992, %v365
      %v1148 = vadd.f32 %v996, %v365
      %v1149 = vadd.f32 %v1000, %v371
      %v1150 = vadd.f32 %v1004, %v371
      %v1151 = vadd.f32 %v1008, %v371
      %v1152 = vadd.f32 %v1012, %v371
      %v1153 = vadd.f32 %v1016, %v371
      %v1154 = vadd.f32 %v1020, %v371
      %v1155 = vadd.f32 %v1024, %v371
      %v1156 = vadd.f32 %v1028, %v371
      %v1157 = vmax.f32 %v1093, 0.0
      %v1158 = vmax.f32 %v1094, 0.0
      %v1159 = vmax.f32 %v1095, 0.0
      %v1160 = vmax.f32 %v1096, 0.0
      %v1161 = vmax.f32 %v1097, 0.0
      %v1162 = vmax.f32 %v1098, 0.0
      %v1163 = vmax.f32 %v1099, 0.0
      %v1164 = vmax.f32 %v1100, 0.0
      %v1165 = vmax.f32 %v1101, 0.0
      %v1166 = vmax.f32 %v1102, 0.0
      %v1167 = vmax.f32 %v1103, 0.0
      %v1168 = vmax.f32 %v1104, 0.0
      %v1169 = vmax.f32 %v1105, 0.0
      %v1170 = vmax.f32 %v1106, 0.0
      %v1171 = vmax.f32 %v1107, 0.0
      %v1172 = vmax.f32 %v1108, 0.0
      %v1173 = vmax.f32 %v1109, 0.0
      %v1174 = vmax.f32 %v1110, 0.0
      %v1175 = vmax.f32 %v1111, 0.0
      %v1176 = vmax.f32 %v1112, 0.0
      %v1177 = vmax.f32 %v1113, 0.0
      %v1178 = vmax.f32 %v1114, 0.0
      %v1179 = vmax.f32 %v1115, 0.0
      %v1180 = vmax.f32 %v1116, 0.0
      %v1181 = vmax.f32 %v1117, 0.0
      %v1182 = vmax.f32 %v1118, 0.0
      %v1183 = vmax.f32 %v1119, 0.0
      %v1184 = vmax.f32 %v1120, 0.0
      %v1185 = vmax.f32 %v1121, 0.0
      %v1186 = vmax.f32 %v1122, 0.0
      %v1187 = vmax.f32 %v1123, 0.0
      %v1188 = vmax.f32 %v1124, 0.0
      %v1189 = vmax.f32 %v1125, 0.0
      %v1190 = vmax.f32 %v1126, 0.0
      %v1191 = vmax.f32 %v1127, 0.0
      %v1192 = vmax.f32 %v1128, 0.0
      %v1193 = vmax.f32 %v1129, 0.0
      %v1194 = vmax.f32 %v1130, 0.0
      %v1195 = vmax.f32 %v1131, 0.0
      %v1196 = vmax.f32 %v1132, 0.0
      %v1197 = vmax.f32 %v1133, 0.0
      %v1198 = vmax.f32 %v1134, 0.0
      %v1199 = vmax.f32 %v1135, 0.0
      %v1200 = vmax.f32 %v1136, 0.0
      %v1201 = vmax.f32 %v1137, 0.0
      %v1202 = vmax.f32 %v1138, 0.0
      %v1203 = vmax.f32 %v1139, 0.0
      %v1204 = vmax.f32 %v1140, 0.0
      %v1205 = vmax.f32 %v1141, 0.0
      %v1206 = vmax.f32 %v1142, 0.0
      %v1207 = vmax.f32 %v1143, 0.0
      %v1208 = vmax.f32 %v1144, 0.0
      %v1209 = vmax.f32 %v1145, 0.0
      %v1210 = vmax.f32 %v1146, 0.0
      %v1211 = vmax.f32 %v1147, 0.0
      %v1212 = vmax.f32 %v1148, 0.0
      %v1213 = vmax.f32 %v1149, 0.0
      %v1214 = vmax.f32 %v1150, 0.0
      %v1215 = vmax.f32 %v1151, 0.0
      %v1216 = vmax.f32 %v1152, 0.0
      %v1217 = vmax.f32 %v1153, 0.0
      %v1218 = vmax.f32 %v1154, 0.0
      %v1219 = vmax.f32 %v1155, 0.0
      %v1220 = vmax.f32 %v1156, 0.0
      %v1221 = vld [vmem:[%s2] sm:$0xff]
      %v1222 = vld [vmem:[%s2 + $0x8] sm:$0xff]
      %v1223 = vld [vmem:[%s2 + $0x10] sm:$0xff]
      %v1224 = vld [vmem:[%s2 + $0x18] sm:$0xff]
      %v1225 = vld [vmem:[%s2 + $0x20] sm:$0xff]
      %v1226 = vld [vmem:[%s2 + $0x28] sm:$0xff]
      %v1227 = vld [vmem:[%s2 + $0x30] sm:$0xff]
      %v1228 = vld [vmem:[%s2 + $0x38] sm:$0xff]
      %v1229 = vld [vmem:[%s2 + $0x40] sm:$0xff]
      %v1230 = vld [vmem:[%s2 + $0x48] sm:$0xff]
      %v1231 = vld [vmem:[%s2 + $0x50] sm:$0xff]
      %v1232 = vld [vmem:[%s2 + $0x58] sm:$0xff]
      %v1233 = vld [vmem:[%s2 + $0x60] sm:$0xff]
      %v1234 = vld [vmem:[%s2 + $0x68] sm:$0xff]
      %v1235 = vld [vmem:[%s2 + $0x70] sm:$0xff]
      %v1236 = vld [vmem:[%s2 + $0x78] sm:$0xff]
      %1237 = vmatprep.subr.mxu0 0.0
      %1238 = vmatpush1.msra.mxu0 %v1221
      %1239 = vmatprep.subr.mxu0 0.0
      %1240 = vmatpush1.msra.mxu0 %v1222
      %1241 = vmatprep.subr.mxu0 0.0
      %1242 = vmatpush1.msra.mxu0 %v1223
      %1243 = vmatprep.subr.mxu0 0.0
      %1244 = vmatpush1.msra.mxu0 %v1224
      %1245 = vmatprep.subr.mxu0 0.0
      %1246 = vmatpush1.msra.mxu0 %v1225
      %1247 = vmatprep.subr.mxu0 0.0
      %1248 = vmatpush1.msra.mxu0 %v1226
      %1249 = vmatprep.subr.mxu0 0.0
      %1250 = vmatpush1.msra.mxu0 %v1227
      %1251 = vmatprep.subr.mxu0 0.0
      %1252 = vmatpush1.msra.mxu0 %v1228
      %1253 = vmatprep.subr.mxu0 0.0
      %1254 = vmatpush1.msra.mxu0 %v1229
      %1255 = vmatprep.subr.mxu0 0.0
      %1256 = vmatpush1.msra.mxu0 %v1230
      %1257 = vmatprep.subr.mxu0 0.0
      %1258 = vmatpush1.msra.mxu0 %v1231
      %1259 = vmatprep.subr.mxu0 0.0
      %1260 = vmatpush1.msra.mxu0 %v1232
      %1261 = vmatprep.subr.mxu0 0.0
      %1262 = vmatpush1.msra.mxu0 %v1233
      %1263 = vmatprep.subr.mxu0 0.0
      %1264 = vmatpush1.msra.mxu0 %v1234
      %1265 = vmatprep.subr.mxu0 0.0
      %1266 = vmatpush1.msra.mxu0 %v1235
      %1267 = vmatprep.subr.mxu0 0.0
      %1268 = vmatpush1.msra.mxu0 %v1236
      %1269 = vmatprep.subr.mxu0 0.0
      %1270 = vmatpush1.msra.mxu0 0.0
      %1271 = vmatprep.subr.mxu0 0.0
      %1272 = vmatpush1.msra.mxu0 0.0
      %1273 = vmatprep.subr.mxu0 0.0
      %1274 = vmatpush1.msra.mxu0 0.0
      %1275 = vmatprep.subr.mxu0 0.0
      %1276 = vmatpush1.msra.mxu0 0.0
      %1277 = vmatprep.subr.mxu0 0.0
      %1278 = vmatpush1.msra.mxu0 0.0
      %1279 = vmatprep.subr.mxu0 0.0
      %1280 = vmatpush1.msra.mxu0 0.0
      %1281 = vmatprep.subr.mxu0 0.0
      %1282 = vmatpush1.msra.mxu0 0.0
      %1283 = vmatprep.subr.mxu0 0.0
      %1284 = vmatpush1.msra.mxu0 0.0
      %1285 = vmatprep.subr.mxu0 0.0
      %1286 = vmatpush1.msra.mxu0 0.0
      %1287 = vmatprep.subr.mxu0 0.0
      %1288 = vmatpush1.msra.mxu0 0.0
      %1289 = vmatprep.subr.mxu0 0.0
      %1290 = vmatpush1.msra.mxu0 0.0
      %1291 = vmatprep.subr.mxu0 0.0
      %1292 = vmatpush1.msra.mxu0 0.0
      %1293 = vmatprep.subr.mxu0 0.0
      %1294 = vmatpush1.msra.mxu0 0.0
      %1295 = vmatprep.subr.mxu0 0.0
      %1296 = vmatpush1.msra.mxu0 0.0
      %1297 = vmatprep.subr.mxu0 0.0
      %1298 = vmatpush1.msra.mxu0 0.0
      %1299 = vmatprep.subr.mxu0 0.0
      %1300 = vmatpush1.msra.mxu0 0.0
      %1301 = vmatprep.mubr.f32.mxu0 0.0
      %1302 = vmatmul.mubr.f32.gmra.mrb[0].mxu0 %v1157
      %v1303 = vpop.f32.mrb[0].mxu0
      %v1304 = vadd.f32 0.0, %v1303
      %v1305 = vpop.f32.mrb[0].mxu0
      %1306 = vmatprep.mubr.f32.mxu0 0.0
      %1307 = vmatmul.mubr.f32.gmra.mrb[0].mxu0 %v1158
      %v1308 = vpop.f32.mrb[0].mxu0
      %v1309 = vadd.f32 0.0, %v1308
      %v1310 = vpop.f32.mrb[0].mxu0
      %1311 = vmatprep.mubr.f32.mxu0 0.0
      %1312 = vmatmul.mubr.f32.gmra.mrb[0].mxu0 %v1159
      %v1313 = vpop.f32.mrb[0].mxu0
      %v1314 = vadd.f32 0.0, %v1313
      %v1315 = vpop.f32.mrb[0].mxu0
      %1316 = vmatprep.mubr.f32.mxu0 0.0
      %1317 = vmatmul.mubr.f32.gmra.mrb[0].mxu0 %v1160
      %v1318 = vpop.f32.mrb[0].mxu0
      %v1319 = vadd.f32 0.0, %v1318
      %v1320 = vpop.f32.mrb[0].mxu0
      %1321 = vmatprep.mubr.f32.mxu0 0.0
      %1322 = vmatmul.mubr.f32.gmra.mrb[0].mxu0 %v1161
      %v1323 = vpop.f32.mrb[0].mxu0
      %v1324 = vadd.f32 0.0, %v1323
      %v1325 = vpop.f32.mrb[0].mxu0
      %1326 = vmatprep.mubr.f32.mxu0 0.0
      %1327 = vmatmul.mubr.f32.gmra.mrb[0].mxu0 %v1162
      %v1328 = vpop.f32.mrb[0].mxu0
      %v1329 = vadd.f32 0.0, %v1328
      %v1330 = vpop.f32.mrb[0].mxu0
      %1331 = vmatprep.mubr.f32.mxu0 0.0
      %1332 = vmatmul.mubr.f32.gmra.mrb[0].mxu0 %v1163
      %v1333 = vpop.f32.mrb[0].mxu0
      %v1334 = vadd.f32 0.0, %v1333
      %v1335 = vpop.f32.mrb[0].mxu0
      %1336 = vmatprep.mubr.f32.mxu0 0.0
      %1337 = vmatmul.mubr.f32.gmra.mrb[0].mxu0 %v1164
      %v1338 = vpop.f32.mrb[0].mxu0
      %v1339 = vadd.f32 0.0, %v1338
      %v1340 = vpop.f32.mrb[0].mxu0
      %1341 = vmatprep.mubr.f32.mxu0 0.0
      %1342 = vmatmul.mubr.f32.gmra.mrb[0].mxu0 %v1165
      %v1343 = vpop.f32.mrb[0].mxu0
      %v1344 = vadd.f32 0.0, %v1343
      %v1345 = vpop.f32.mrb[0].mxu0
      %1346 = vmatprep.mubr.f32.mxu0 0.0
      %1347 = vmatmul.mubr.f32.gmra.mrb[0].mxu0 %v1166
      %v1348 = vpop.f32.mrb[0].mxu0
      %v1349 = vadd.f32 0.0, %v1348
      %v1350 = vpop.f32.mrb[0].mxu0
      %1351 = vmatprep.mubr.f32.mxu0 0.0
      %1352 = vmatmul.mubr.f32.gmra.mrb[0].mxu0 %v1167
      %v1353 = vpop.f32.mrb[0].mxu0
      %v1354 = vadd.f32 0.0, %v1353
      %v1355 = vpop.f32.mrb[0].mxu0
      %1356 = vmatprep.mubr.f32.mxu0 0.0
      %1357 = vmatmul.mubr.f32.gmra.mrb[0].mxu0 %v1168
      %v1358 = vpop.f32.mrb[0].mxu0
      %v1359 = vadd.f32 0.0, %v1358
      %v1360 = vpop.f32.mrb[0].mxu0
      %1361 = vmatprep.mubr.f32.mxu0 0.0
      %1362 = vmatmul.mubr.f32.gmra.mrb[0].mxu0 %v1169
      %v1363 = vpop.f32.mrb[0].mxu0
      %v1364 = vadd.f32 0.0, %v1363
      %v1365 = vpop.f32.mrb[0].mxu0
      %1366 = vmatprep.mubr.f32.mxu0 0.0
      %1367 = vmatmul.mubr.f32.gmra.mrb[0].mxu0 %v1170
      %v1368 = vpop.f32.mrb[0].mxu0
      %v1369 = vadd.f32 0.0, %v1368
      %v1370 = vpop.f32.mrb[0].mxu0
      %1371 = vmatprep.mubr.f32.mxu0 0.0
      %1372 = vmatmul.mubr.f32.gmra.mrb[0].mxu0 %v1171
      %v1373 = vpop.f32.mrb[0].mxu0
      %v1374 = vadd.f32 0.0, %v1373
      %v1375 = vpop.f32.mrb[0].mxu0
      %1376 = vmatprep.mubr.f32.mxu0 0.0
      %1377 = vmatmul.mubr.f32.gmra.mrb[0].mxu0 %v1172
      %v1378 = vpop.f32.mrb[0].mxu0
      %v1379 = vadd.f32 0.0, %v1378
      %v1380 = vpop.f32.mrb[0].mxu0
      %1381 = vmatprep.mubr.f32.mxu0 0.0
      %1382 = vmatmul.mubr.f32.gmra.mrb[0].mxu0 %v1173
      %v1383 = vpop.f32.mrb[0].mxu0
      %v1384 = vadd.f32 0.0, %v1383
      %v1385 = vpop.f32.mrb[0].mxu0
      %1386 = vmatprep.mubr.f32.mxu0 0.0
      %1387 = vmatmul.mubr.f32.gmra.mrb[0].mxu0 %v1174
      %v1388 = vpop.f32.mrb[0].mxu0
      %v1389 = vadd.f32 0.0, %v1388
      %v1390 = vpop.f32.mrb[0].mxu0
      %1391 = vmatprep.mubr.f32.mxu0 0.0
      %1392 = vmatmul.mubr.f32.gmra.mrb[0].mxu0 %v1175
      %v1393 = vpop.f32.mrb[0].mxu0
      %v1394 = vadd.f32 0.0, %v1393
      %v1395 = vpop.f32.mrb[0].mxu0
      %1396 = vmatprep.mubr.f32.mxu0 0.0
      %1397 = vmatmul.mubr.f32.gmra.mrb[0].mxu0 %v1176
      %v1398 = vpop.f32.mrb[0].mxu0
      %v1399 = vadd.f32 0.0, %v1398
      %v1400 = vpop.f32.mrb[0].mxu0
      %1401 = vmatprep.mubr.f32.mxu0 0.0
      %1402 = vmatmul.mubr.f32.gmra.mrb[0].mxu0 %v1177
      %v1403 = vpop.f32.mrb[0].mxu0
      %v1404 = vadd.f32 0.0, %v1403
      %v1405 = vpop.f32.mrb[0].mxu0
      %1406 = vmatprep.mubr.f32.mxu0 0.0
      %1407 = vmatmul.mubr.f32.gmra.mrb[0].mxu0 %v1178
      %v1408 = vpop.f32.mrb[0].mxu0
      %v1409 = vadd.f32 0.0, %v1408
      %v1410 = vpop.f32.mrb[0].mxu0
      %1411 = vmatprep.mubr.f32.mxu0 0.0
      %1412 = vmatmul.mubr.f32.gmra.mrb[0].mxu0 %v1179
      %v1413 = vpop.f32.mrb[0].mxu0
      %v1414 = vadd.f32 0.0, %v1413
      %v1415 = vpop.f32.mrb[0].mxu0
      %1416 = vmatprep.mubr.f32.mxu0 0.0
      %1417 = vmatmul.mubr.f32.gmra.mrb[0].mxu0 %v1180
      %v1418 = vpop.f32.mrb[0].mxu0
      %v1419 = vadd.f32 0.0, %v1418
      %v1420 = vpop.f32.mrb[0].mxu0
      %1421 = vmatprep.mubr.f32.mxu0 0.0
      %1422 = vmatmul.mubr.f32.gmra.mrb[0].mxu0 %v1181
      %v1423 = vpop.f32.mrb[0].mxu0
      %v1424 = vadd.f32 0.0, %v1423
      %v1425 = vpop.f32.mrb[0].mxu0
      %1426 = vmatprep.mubr.f32.mxu0 0.0
      %1427 = vmatmul.mubr.f32.gmra.mrb[0].mxu0 %v1182
      %v1428 = vpop.f32.mrb[0].mxu0
      %v1429 = vadd.f32 0.0, %v1428
      %v1430 = vpop.f32.mrb[0].mxu0
      %1431 = vmatprep.mubr.f32.mxu0 0.0
      %1432 = vmatmul.mubr.f32.gmra.mrb[0].mxu0 %v1183
      %v1433 = vpop.f32.mrb[0].mxu0
      %v1434 = vadd.f32 0.0, %v1433
      %v1435 = vpop.f32.mrb[0].mxu0
      %1436 = vmatprep.mubr.f32.mxu0 0.0
      %1437 = vmatmul.mubr.f32.gmra.mrb[0].mxu0 %v1184
      %v1438 = vpop.f32.mrb[0].mxu0
      %v1439 = vadd.f32 0.0, %v1438
      %v1440 = vpop.f32.mrb[0].mxu0
      %1441 = vmatprep.mubr.f32.mxu0 0.0
      %1442 = vmatmul.mubr.f32.gmra.mrb[0].mxu0 %v1185
      %v1443 = vpop.f32.mrb[0].mxu0
      %v1444 = vadd.f32 0.0, %v1443
      %v1445 = vpop.f32.mrb[0].mxu0
      %1446 = vmatprep.mubr.f32.mxu0 0.0
      %1447 = vmatmul.mubr.f32.gmra.mrb[0].mxu0 %v1186
      %v1448 = vpop.f32.mrb[0].mxu0
      %v1449 = vadd.f32 0.0, %v1448
      %v1450 = vpop.f32.mrb[0].mxu0
      %1451 = vmatprep.mubr.f32.mxu0 0.0
      %1452 = vmatmul.mubr.f32.gmra.mrb[0].mxu0 %v1187
      %v1453 = vpop.f32.mrb[0].mxu0
      %v1454 = vadd.f32 0.0, %v1453
      %v1455 = vpop.f32.mrb[0].mxu0
      %1456 = vmatprep.mubr.f32.mxu0 0.0
      %1457 = vmatmul.mubr.f32.gmra.mrb[0].mxu0 %v1188
      %v1458 = vpop.f32.mrb[0].mxu0
      %v1459 = vadd.f32 0.0, %v1458
      %v1460 = vpop.f32.mrb[0].mxu0
      %1461 = vmatprep.mubr.f32.mxu0 0.0
      %1462 = vmatmul.mubr.f32.gmra.mrb[0].mxu0 %v1189
      %v1463 = vpop.f32.mrb[0].mxu0
      %v1464 = vadd.f32 0.0, %v1463
      %v1465 = vpop.f32.mrb[0].mxu0
      %1466 = vmatprep.mubr.f32.mxu0 0.0
      %1467 = vmatmul.mubr.f32.gmra.mrb[0].mxu0 %v1190
      %v1468 = vpop.f32.mrb[0].mxu0
      %v1469 = vadd.f32 0.0, %v1468
      %v1470 = vpop.f32.mrb[0].mxu0
      %1471 = vmatprep.mubr.f32.mxu0 0.0
      %1472 = vmatmul.mubr.f32.gmra.mrb[0].mxu0 %v1191
      %v1473 = vpop.f32.mrb[0].mxu0
      %v1474 = vadd.f32 0.0, %v1473
      %v1475 = vpop.f32.mrb[0].mxu0
      %1476 = vmatprep.mubr.f32.mxu0 0.0
      %1477 = vmatmul.mubr.f32.gmra.mrb[0].mxu0 %v1192
      %v1478 = vpop.f32.mrb[0].mxu0
      %v1479 = vadd.f32 0.0, %v1478
      %v1480 = vpop.f32.mrb[0].mxu0
      %1481 = vmatprep.mubr.f32.mxu0 0.0
      %1482 = vmatmul.mubr.f32.gmra.mrb[0].mxu0 %v1193
      %v1483 = vpop.f32.mrb[0].mxu0
      %v1484 = vadd.f32 0.0, %v1483
      %v1485 = vpop.f32.mrb[0].mxu0
      %1486 = vmatprep.mubr.f32.mxu0 0.0
      %1487 = vmatmul.mubr.f32.gmra.mrb[0].mxu0 %v1194
      %v1488 = vpop.f32.mrb[0].mxu0
      %v1489 = vadd.f32 0.0, %v1488
      %v1490 = vpop.f32.mrb[0].mxu0
      %1491 = vmatprep.mubr.f32.mxu0 0.0
      %1492 = vmatmul.mubr.f32.gmra.mrb[0].mxu0 %v1195
      %v1493 = vpop.f32.mrb[0].mxu0
      %v1494 = vadd.f32 0.0, %v1493
      %v1495 = vpop.f32.mrb[0].mxu0
      %1496 = vmatprep.mubr.f32.mxu0 0.0
      %1497 = vmatmul.mubr.f32.gmra.mrb[0].mxu0 %v1196
      %v1498 = vpop.f32.mrb[0].mxu0
      %v1499 = vadd.f32 0.0, %v1498
      %v1500 = vpop.f32.mrb[0].mxu0
      %1501 = vmatprep.mubr.f32.mxu0 0.0
      %1502 = vmatmul.mubr.f32.gmra.mrb[0].mxu0 %v1197
      %v1503 = vpop.f32.mrb[0].mxu0
      %v1504 = vadd.f32 0.0, %v1503
      %v1505 = vpop.f32.mrb[0].mxu0
      %1506 = vmatprep.mubr.f32.mxu0 0.0
      %1507 = vmatmul.mubr.f32.gmra.mrb[0].mxu0 %v1198
      %v1508 = vpop.f32.mrb[0].mxu0
      %v1509 = vadd.f32 0.0, %v1508
      %v1510 = vpop.f32.mrb[0].mxu0
      %1511 = vmatprep.mubr.f32.mxu0 0.0
      %1512 = vmatmul.mubr.f32.gmra.mrb[0].mxu0 %v1199
      %v1513 = vpop.f32.mrb[0].mxu0
      %v1514 = vadd.f32 0.0, %v1513
      %v1515 = vpop.f32.mrb[0].mxu0
      %1516 = vmatprep.mubr.f32.mxu0 0.0
      %1517 = vmatmul.mubr.f32.gmra.mrb[0].mxu0 %v1200
      %v1518 = vpop.f32.mrb[0].mxu0
      %v1519 = vadd.f32 0.0, %v1518
      %v1520 = vpop.f32.mrb[0].mxu0
      %1521 = vmatprep.mubr.f32.mxu0 0.0
      %1522 = vmatmul.mubr.f32.gmra.mrb[0].mxu0 %v1201
      %v1523 = vpop.f32.mrb[0].mxu0
      %v1524 = vadd.f32 0.0, %v1523
      %v1525 = vpop.f32.mrb[0].mxu0
      %1526 = vmatprep.mubr.f32.mxu0 0.0
      %1527 = vmatmul.mubr.f32.gmra.mrb[0].mxu0 %v1202
      %v1528 = vpop.f32.mrb[0].mxu0
      %v1529 = vadd.f32 0.0, %v1528
      %v1530 = vpop.f32.mrb[0].mxu0
      %1531 = vmatprep.mubr.f32.mxu0 0.0
      %1532 = vmatmul.mubr.f32.gmra.mrb[0].mxu0 %v1203
      %v1533 = vpop.f32.mrb[0].mxu0
      %v1534 = vadd.f32 0.0, %v1533
      %v1535 = vpop.f32.mrb[0].mxu0
      %1536 = vmatprep.mubr.f32.mxu0 0.0
      %1537 = vmatmul.mubr.f32.gmra.mrb[0].mxu0 %v1204
      %v1538 = vpop.f32.mrb[0].mxu0
      %v1539 = vadd.f32 0.0, %v1538
      %v1540 = vpop.f32.mrb[0].mxu0
      %1541 = vmatprep.mubr.f32.mxu0 0.0
      %1542 = vmatmul.mubr.f32.gmra.mrb[0].mxu0 %v1205
      %v1543 = vpop.f32.mrb[0].mxu0
      %v1544 = vadd.f32 0.0, %v1543
      %v1545 = vpop.f32.mrb[0].mxu0
      %1546 = vmatprep.mubr.f32.mxu0 0.0
      %1547 = vmatmul.mubr.f32.gmra.mrb[0].mxu0 %v1206
      %v1548 = vpop.f32.mrb[0].mxu0
      %v1549 = vadd.f32 0.0, %v1548
      %v1550 = vpop.f32.mrb[0].mxu0
      %1551 = vmatprep.mubr.f32.mxu0 0.0
      %1552 = vmatmul.mubr.f32.gmra.mrb[0].mxu0 %v1207
      %v1553 = vpop.f32.mrb[0].mxu0
      %v1554 = vadd.f32 0.0, %v1553
      %v1555 = vpop.f32.mrb[0].mxu0
      %1556 = vmatprep.mubr.f32.mxu0 0.0
      %1557 = vmatmul.mubr.f32.gmra.mrb[0].mxu0 %v1208
      %v1558 = vpop.f32.mrb[0].mxu0
      %v1559 = vadd.f32 0.0, %v1558
      %v1560 = vpop.f32.mrb[0].mxu0
      %1561 = vmatprep.mubr.f32.mxu0 0.0
      %1562 = vmatmul.mubr.f32.gmra.mrb[0].mxu0 %v1209
      %v1563 = vpop.f32.mrb[0].mxu0
      %v1564 = vadd.f32 0.0, %v1563
      %v1565 = vpop.f32.mrb[0].mxu0
      %1566 = vmatprep.mubr.f32.mxu0 0.0
      %1567 = vmatmul.mubr.f32.gmra.mrb[0].mxu0 %v1210
      %v1568 = vpop.f32.mrb[0].mxu0
      %v1569 = vadd.f32 0.0, %v1568
      %v1570 = vpop.f32.mrb[0].mxu0
      %1571 = vmatprep.mubr.f32.mxu0 0.0
      %1572 = vmatmul.mubr.f32.gmra.mrb[0].mxu0 %v1211
      %v1573 = vpop.f32.mrb[0].mxu0
      %v1574 = vadd.f32 0.0, %v1573
      %v1575 = vpop.f32.mrb[0].mxu0
      %1576 = vmatprep.mubr.f32.mxu0 0.0
      %1577 = vmatmul.mubr.f32.gmra.mrb[0].mxu0 %v1212
      %v1578 = vpop.f32.mrb[0].mxu0
      %v1579 = vadd.f32 0.0, %v1578
      %v1580 = vpop.f32.mrb[0].mxu0
      %1581 = vmatprep.mubr.f32.mxu0 0.0
      %1582 = vmatmul.mubr.f32.gmra.mrb[0].mxu0 %v1213
      %v1583 = vpop.f32.mrb[0].mxu0
      %v1584 = vadd.f32 0.0, %v1583
      %v1585 = vpop.f32.mrb[0].mxu0
      %1586 = vmatprep.mubr.f32.mxu0 0.0
      %1587 = vmatmul.mubr.f32.gmra.mrb[0].mxu0 %v1214
      %v1588 = vpop.f32.mrb[0].mxu0
      %v1589 = vadd.f32 0.0, %v1588
      %v1590 = vpop.f32.mrb[0].mxu0
      %1591 = vmatprep.mubr.f32.mxu0 0.0
      %1592 = vmatmul.mubr.f32.gmra.mrb[0].mxu0 %v1215
      %v1593 = vpop.f32.mrb[0].mxu0
      %v1594 = vadd.f32 0.0, %v1593
      %v1595 = vpop.f32.mrb[0].mxu0
      %1596 = vmatprep.mubr.f32.mxu0 0.0
      %1597 = vmatmul.mubr.f32.gmra.mrb[0].mxu0 %v1216
      %v1598 = vpop.f32.mrb[0].mxu0
      %v1599 = vadd.f32 0.0, %v1598
      %v1600 = vpop.f32.mrb[0].mxu0
      %1601 = vmatprep.mubr.f32.mxu0 0.0
      %1602 = vmatmul.mubr.f32.gmra.mrb[0].mxu0 %v1217
      %v1603 = vpop.f32.mrb[0].mxu0
      %v1604 = vadd.f32 0.0, %v1603
      %v1605 = vpop.f32.mrb[0].mxu0
      %1606 = vmatprep.mubr.f32.mxu0 0.0
      %1607 = vmatmul.mubr.f32.gmra.mrb[0].mxu0 %v1218
      %v1608 = vpop.f32.mrb[0].mxu0
      %v1609 = vadd.f32 0.0, %v1608
      %v1610 = vpop.f32.mrb[0].mxu0
      %1611 = vmatprep.mubr.f32.mxu0 0.0
      %1612 = vmatmul.mubr.f32.gmra.mrb[0].mxu0 %v1219
      %v1613 = vpop.f32.mrb[0].mxu0
      %v1614 = vadd.f32 0.0, %v1613
      %v1615 = vpop.f32.mrb[0].mxu0
      %1616 = vmatprep.mubr.f32.mxu0 0.0
      %1617 = vmatmul.mubr.f32.gmra.mrb[0].mxu0 %v1220
      %v1618 = vpop.f32.mrb[0].mxu0
      %v1619 = vadd.f32 0.0, %v1618
      %v1620 = vpop.f32.mrb[0].mxu0
      %1621 = vdwg.mxu0
      %v1622 = vmax.f32 %v1304, 0.0
      %v1623 = vmax.f32 %v1309, 0.0
      %v1624 = vmax.f32 %v1314, 0.0
      %v1625 = vmax.f32 %v1319, 0.0
      %v1626 = vmax.f32 %v1324, 0.0
      %v1627 = vmax.f32 %v1329, 0.0
      %v1628 = vmax.f32 %v1334, 0.0
      %v1629 = vmax.f32 %v1339, 0.0
      %v1630 = vmax.f32 %v1344, 0.0
      %v1631 = vmax.f32 %v1349, 0.0
      %v1632 = vmax.f32 %v1354, 0.0
      %v1633 = vmax.f32 %v1359, 0.0
      %v1634 = vmax.f32 %v1364, 0.0
      %v1635 = vmax.f32 %v1369, 0.0
      %v1636 = vmax.f32 %v1374, 0.0
      %v1637 = vmax.f32 %v1379, 0.0
      %v1638 = vmax.f32 %v1384, 0.0
      %v1639 = vmax.f32 %v1389, 0.0
      %v1640 = vmax.f32 %v1394, 0.0
      %v1641 = vmax.f32 %v1399, 0.0
      %v1642 = vmax.f32 %v1404, 0.0
      %v1643 = vmax.f32 %v1409, 0.0
      %v1644 = vmax.f32 %v1414, 0.0
      %v1645 = vmax.f32 %v1419, 0.0
      %v1646 = vmax.f32 %v1424, 0.0
      %v1647 = vmax.f32 %v1429, 0.0
      %v1648 = vmax.f32 %v1434, 0.0
      %v1649 = vmax.f32 %v1439, 0.0
      %v1650 = vmax.f32 %v1444, 0.0
      %v1651 = vmax.f32 %v1449, 0.0
      %v1652 = vmax.f32 %v1454, 0.0
      %v1653 = vmax.f32 %v1459, 0.0
      %v1654 = vmax.f32 %v1464, 0.0
      %v1655 = vmax.f32 %v1469, 0.0
      %v1656 = vmax.f32 %v1474, 0.0
      %v1657 = vmax.f32 %v1479, 0.0
      %v1658 = vmax.f32 %v1484, 0.0
      %v1659 = vmax.f32 %v1489, 0.0
      %v1660 = vmax.f32 %v1494, 0.0
      %v1661 = vmax.f32 %v1499, 0.0
      %v1662 = vmax.f32 %v1504, 0.0
      %v1663 = vmax.f32 %v1509, 0.0
      %v1664 = vmax.f32 %v1514, 0.0
      %v1665 = vmax.f32 %v1519, 0.0
      %v1666 = vmax.f32 %v1524, 0.0
      %v1667 = vmax.f32 %v1529, 0.0
      %v1668 = vmax.f32 %v1534, 0.0
      %v1669 = vmax.f32 %v1539, 0.0
      %v1670 = vmax.f32 %v1544, 0.0
      %v1671 = vmax.f32 %v1549, 0.0
      %v1672 = vmax.f32 %v1554, 0.0
      %v1673 = vmax.f32 %v1559, 0.0
      %v1674 = vmax.f32 %v1564, 0.0
      %v1675 = vmax.f32 %v1569, 0.0
      %v1676 = vmax.f32 %v1574, 0.0
      %v1677 = vmax.f32 %v1579, 0.0
      %v1678 = vmax.f32 %v1584, 0.0
      %v1679 = vmax.f32 %v1589, 0.0
      %v1680 = vmax.f32 %v1594, 0.0
      %v1681 = vmax.f32 %v1599, 0.0
      %v1682 = vmax.f32 %v1604, 0.0
      %v1683 = vmax.f32 %v1609, 0.0
      %v1684 = vmax.f32 %v1614, 0.0
      %v1685 = vmax.f32 %v1619, 0.0
      %v1686 = vadd.f32 %v1622, %v1623
      %v1687 = vrot.slane %v1686, 4
      %v1688 = vadd.f32 %v1686, %v1687
      %v1689 = vrot.slane %v1688, 2
      %v1690 = vadd.f32 %v1688, %v1689
      %v1691 = vrot.slane %v1690, 1
      %v1692 = vadd.f32 %v1690, %v1691
      %v1693 = vadd.f32 %v1624, %v1625
      %v1694 = vrot.slane %v1693, 4
      %v1695 = vadd.f32 %v1693, %v1694
      %v1696 = vrot.slane %v1695, 2
      %v1697 = vadd.f32 %v1695, %v1696
      %v1698 = vrot.slane %v1697, 1
      %v1699 = vadd.f32 %v1697, %v1698
      %v1700 = vadd.f32 %v1626, %v1627
      %v1701 = vrot.slane %v1700, 4
      %v1702 = vadd.f32 %v1700, %v1701
      %v1703 = vrot.slane %v1702, 2
      %v1704 = vadd.f32 %v1702, %v1703
      %v1705 = vrot.slane %v1704, 1
      %v1706 = vadd.f32 %v1704, %v1705
      %v1707 = vadd.f32 %v1628, %v1629
      %v1708 = vrot.slane %v1707, 4
      %v1709 = vadd.f32 %v1707, %v1708
      %v1710 = vrot.slane %v1709, 2
      %v1711 = vadd.f32 %v1709, %v1710
      %v1712 = vrot.slane %v1711, 1
      %v1713 = vadd.f32 %v1711, %v1712
      %v1714 = vadd.f32 %v1630, %v1631
      %v1715 = vrot.slane %v1714, 4
      %v1716 = vadd.f32 %v1714, %v1715
      %v1717 = vrot.slane %v1716, 2
      %v1718 = vadd.f32 %v1716, %v1717
      %v1719 = vrot.slane %v1718, 1
      %v1720 = vadd.f32 %v1718, %v1719
      %v1721 = vadd.f32 %v1632, %v1633
      %v1722 = vrot.slane %v1721, 4
      %v1723 = vadd.f32 %v1721, %v1722
      %v1724 = vrot.slane %v1723, 2
      %v1725 = vadd.f32 %v1723, %v1724
      %v1726 = vrot.slane %v1725, 1
      %v1727 = vadd.f32 %v1725, %v1726
      %v1728 = vadd.f32 %v1634, %v1635
      %v1729 = vrot.slane %v1728, 4
      %v1730 = vadd.f32 %v1728, %v1729
      %v1731 = vrot.slane %v1730, 2
      %v1732 = vadd.f32 %v1730, %v1731
      %v1733 = vrot.slane %v1732, 1
      %v1734 = vadd.f32 %v1732, %v1733
      %v1735 = vadd.f32 %v1636, %v1637
      %v1736 = vrot.slane %v1735, 4
      %v1737 = vadd.f32 %v1735, %v1736
      %v1738 = vrot.slane %v1737, 2
      %v1739 = vadd.f32 %v1737, %v1738
      %v1740 = vrot.slane %v1739, 1
      %v1741 = vadd.f32 %v1739, %v1740
      %v1742 = vadd.f32 %v1638, %v1639
      %v1743 = vrot.slane %v1742, 4
      %v1744 = vadd.f32 %v1742, %v1743
      %v1745 = vrot.slane %v1744, 2
      %v1746 = vadd.f32 %v1744, %v1745
      %v1747 = vrot.slane %v1746, 1
      %v1748 = vadd.f32 %v1746, %v1747
      %v1749 = vadd.f32 %v1640, %v1641
      %v1750 = vrot.slane %v1749, 4
      %v1751 = vadd.f32 %v1749, %v1750
      %v1752 = vrot.slane %v1751, 2
      %v1753 = vadd.f32 %v1751, %v1752
      %v1754 = vrot.slane %v1753, 1
      %v1755 = vadd.f32 %v1753, %v1754
      %v1756 = vadd.f32 %v1642, %v1643
      %v1757 = vrot.slane %v1756, 4
      %v1758 = vadd.f32 %v1756, %v1757
      %v1759 = vrot.slane %v1758, 2
      %v1760 = vadd.f32 %v1758, %v1759
      %v1761 = vrot.slane %v1760, 1
      %v1762 = vadd.f32 %v1760, %v1761
      %v1763 = vadd.f32 %v1644, %v1645
      %v1764 = vrot.slane %v1763, 4
      %v1765 = vadd.f32 %v1763, %v1764
      %v1766 = vrot.slane %v1765, 2
      %v1767 = vadd.f32 %v1765, %v1766
      %v1768 = vrot.slane %v1767, 1
      %v1769 = vadd.f32 %v1767, %v1768
      %v1770 = vadd.f32 %v1646, %v1647
      %v1771 = vrot.slane %v1770, 4
      %v1772 = vadd.f32 %v1770, %v1771
      %v1773 = vrot.slane %v1772, 2
      %v1774 = vadd.f32 %v1772, %v1773
      %v1775 = vrot.slane %v1774, 1
      %v1776 = vadd.f32 %v1774, %v1775
      %v1777 = vadd.f32 %v1648, %v1649
      %v1778 = vrot.slane %v1777, 4
      %v1779 = vadd.f32 %v1777, %v1778
      %v1780 = vrot.slane %v1779, 2
      %v1781 = vadd.f32 %v1779, %v1780
      %v1782 = vrot.slane %v1781, 1
      %v1783 = vadd.f32 %v1781, %v1782
      %v1784 = vadd.f32 %v1650, %v1651
      %v1785 = vrot.slane %v1784, 4
      %v1786 = vadd.f32 %v1784, %v1785
      %v1787 = vrot.slane %v1786, 2
      %v1788 = vadd.f32 %v1786, %v1787
      %v1789 = vrot.slane %v1788, 1
      %v1790 = vadd.f32 %v1788, %v1789
      %v1791 = vadd.f32 %v1652, %v1653
      %v1792 = vrot.slane %v1791, 4
      %v1793 = vadd.f32 %v1791, %v1792
      %v1794 = vrot.slane %v1793, 2
      %v1795 = vadd.f32 %v1793, %v1794
      %v1796 = vrot.slane %v1795, 1
      %v1797 = vadd.f32 %v1795, %v1796
      %v1798 = vadd.f32 %v1654, %v1655
      %v1799 = vrot.slane %v1798, 4
      %v1800 = vadd.f32 %v1798, %v1799
      %v1801 = vrot.slane %v1800, 2
      %v1802 = vadd.f32 %v1800, %v1801
      %v1803 = vrot.slane %v1802, 1
      %v1804 = vadd.f32 %v1802, %v1803
      %v1805 = vadd.f32 %v1656, %v1657
      %v1806 = vrot.slane %v1805, 4
      %v1807 = vadd.f32 %v1805, %v1806
      %v1808 = vrot.slane %v1807, 2
      %v1809 = vadd.f32 %v1807, %v1808
      %v1810 = vrot.slane %v1809, 1
      %v1811 = vadd.f32 %v1809, %v1810
      %v1812 = vadd.f32 %v1658, %v1659
      %v1813 = vrot.slane %v1812, 4
      %v1814 = vadd.f32 %v1812, %v1813
      %v1815 = vrot.slane %v1814, 2
      %v1816 = vadd.f32 %v1814, %v1815
      %v1817 = vrot.slane %v1816, 1
      %v1818 = vadd.f32 %v1816, %v1817
      %v1819 = vadd.f32 %v1660, %v1661
      %v1820 = vrot.slane %v1819, 4
      %v1821 = vadd.f32 %v1819, %v1820
      %v1822 = vrot.slane %v1821, 2
      %v1823 = vadd.f32 %v1821, %v1822
      %v1824 = vrot.slane %v1823, 1
      %v1825 = vadd.f32 %v1823, %v1824
      %v1826 = vadd.f32 %v1662, %v1663
      %v1827 = vrot.slane %v1826, 4
      %v1828 = vadd.f32 %v1826, %v1827
      %v1829 = vrot.slane %v1828, 2
      %v1830 = vadd.f32 %v1828, %v1829
      %v1831 = vrot.slane %v1830, 1
      %v1832 = vadd.f32 %v1830, %v1831
      %v1833 = vadd.f32 %v1664, %v1665
      %v1834 = vrot.slane %v1833, 4
      %v1835 = vadd.f32 %v1833, %v1834
      %v1836 = vrot.slane %v1835, 2
      %v1837 = vadd.f32 %v1835, %v1836
      %v1838 = vrot.slane %v1837, 1
      %v1839 = vadd.f32 %v1837, %v1838
      %v1840 = vadd.f32 %v1666, %v1667
      %v1841 = vrot.slane %v1840, 4
      %v1842 = vadd.f32 %v1840, %v1841
      %v1843 = vrot.slane %v1842, 2
      %v1844 = vadd.f32 %v1842, %v1843
      %v1845 = vrot.slane %v1844, 1
      %v1846 = vadd.f32 %v1844, %v1845
      %v1847 = vadd.f32 %v1668, %v1669
      %v1848 = vrot.slane %v1847, 4
      %v1849 = vadd.f32 %v1847, %v1848
      %v1850 = vrot.slane %v1849, 2
      %v1851 = vadd.f32 %v1849, %v1850
      %v1852 = vrot.slane %v1851, 1
      %v1853 = vadd.f32 %v1851, %v1852
      %v1854 = vadd.f32 %v1670, %v1671
      %v1855 = vrot.slane %v1854, 4
      %v1856 = vadd.f32 %v1854, %v1855
      %v1857 = vrot.slane %v1856, 2
      %v1858 = vadd.f32 %v1856, %v1857
      %v1859 = vrot.slane %v1858, 1
      %v1860 = vadd.f32 %v1858, %v1859
      %v1861 = vadd.f32 %v1672, %v1673
      %v1862 = vrot.slane %v1861, 4
      %v1863 = vadd.f32 %v1861, %v1862
      %v1864 = vrot.slane %v1863, 2
      %v1865 = vadd.f32 %v1863, %v1864
      %v1866 = vrot.slane %v1865, 1
      %v1867 = vadd.f32 %v1865, %v1866
      %v1868 = vadd.f32 %v1674, %v1675
      %v1869 = vrot.slane %v1868, 4
      %v1870 = vadd.f32 %v1868, %v1869
      %v1871 = vrot.slane %v1870, 2
      %v1872 = vadd.f32 %v1870, %v1871
      %v1873 = vrot.slane %v1872, 1
      %v1874 = vadd.f32 %v1872, %v1873
      %v1875 = vadd.f32 %v1676, %v1677
      %v1876 = vrot.slane %v1875, 4
      %v1877 = vadd.f32 %v1875, %v1876
      %v1878 = vrot.slane %v1877, 2
      %v1879 = vadd.f32 %v1877, %v1878
      %v1880 = vrot.slane %v1879, 1
      %v1881 = vadd.f32 %v1879, %v1880
      %v1882 = vadd.f32 %v1678, %v1679
      %v1883 = vrot.slane %v1882, 4
      %v1884 = vadd.f32 %v1882, %v1883
      %v1885 = vrot.slane %v1884, 2
      %v1886 = vadd.f32 %v1884, %v1885
      %v1887 = vrot.slane %v1886, 1
      %v1888 = vadd.f32 %v1886, %v1887
      %v1889 = vadd.f32 %v1680, %v1681
      %v1890 = vrot.slane %v1889, 4
      %v1891 = vadd.f32 %v1889, %v1890
      %v1892 = vrot.slane %v1891, 2
      %v1893 = vadd.f32 %v1891, %v1892
      %v1894 = vrot.slane %v1893, 1
      %v1895 = vadd.f32 %v1893, %v1894
      %v1896 = vadd.f32 %v1682, %v1683
      %v1897 = vrot.slane %v1896, 4
      %v1898 = vadd.f32 %v1896, %v1897
      %v1899 = vrot.slane %v1898, 2
      %v1900 = vadd.f32 %v1898, %v1899
      %v1901 = vrot.slane %v1900, 1
      %v1902 = vadd.f32 %v1900, %v1901
      %v1903 = vadd.f32 %v1684, %v1685
      %v1904 = vrot.slane %v1903, 4
      %v1905 = vadd.f32 %v1903, %v1904
      %v1906 = vrot.slane %v1905, 2
      %v1907 = vadd.f32 %v1905, %v1906
      %v1908 = vrot.slane %v1907, 1
      %v1909 = vadd.f32 %v1907, %v1908
      %v1910 = vrcp.pop 16.0
      %v1911 = vmul.f32 %v1692, %v1910
      %v1912 = vmul.f32 %v1699, %v1910
      %v1913 = vmul.f32 %v1706, %v1910
      %v1914 = vmul.f32 %v1713, %v1910
      %v1915 = vmul.f32 %v1720, %v1910
      %v1916 = vmul.f32 %v1727, %v1910
      %v1917 = vmul.f32 %v1734, %v1910
      %v1918 = vmul.f32 %v1741, %v1910
      %v1919 = vmul.f32 %v1748, %v1910
      %v1920 = vmul.f32 %v1755, %v1910
      %v1921 = vmul.f32 %v1762, %v1910
      %v1922 = vmul.f32 %v1769, %v1910
      %v1923 = vmul.f32 %v1776, %v1910
      %v1924 = vmul.f32 %v1783, %v1910
      %v1925 = vmul.f32 %v1790, %v1910
      %v1926 = vmul.f32 %v1797, %v1910
      %v1927 = vmul.f32 %v1804, %v1910
      %v1928 = vmul.f32 %v1811, %v1910
      %v1929 = vmul.f32 %v1818, %v1910
      %v1930 = vmul.f32 %v1825, %v1910
      %v1931 = vmul.f32 %v1832, %v1910
      %v1932 = vmul.f32 %v1839, %v1910
      %v1933 = vmul.f32 %v1846, %v1910
      %v1934 = vmul.f32 %v1853, %v1910
      %v1935 = vmul.f32 %v1860, %v1910
      %v1936 = vmul.f32 %v1867, %v1910
      %v1937 = vmul.f32 %v1874, %v1910
      %v1938 = vmul.f32 %v1881, %v1910
      %v1939 = vmul.f32 %v1888, %v1910
      %v1940 = vmul.f32 %v1895, %v1910
      %v1941 = vmul.f32 %v1902, %v1910
      %v1942 = vmul.f32 %v1909, %v1910
      %s1943 = scalar_lea.vmem %s2, 128
      %v1944 = vld [vmem:[%s1943] sm:$0xff]
      %v1945 = vld [vmem:[%s1943 + $0x8] sm:$0xff]
      %v1946 = vld [vmem:[%s1943 + $0x10] sm:$0xff]
      %v1947 = vld [vmem:[%s1943 + $0x18] sm:$0xff]
      %v1948 = vld [vmem:[%s1943 + $0x20] sm:$0xff]
      %v1949 = vld [vmem:[%s1943 + $0x28] sm:$0xff]
      %v1950 = vld [vmem:[%s1943 + $0x30] sm:$0xff]
      %v1951 = vld [vmem:[%s1943 + $0x38] sm:$0xff]
      %v1952 = vld [vmem:[%s1943 + $0x40] sm:$0xff]
      %v1953 = vld [vmem:[%s1943 + $0x48] sm:$0xff]
      %v1954 = vld [vmem:[%s1943 + $0x50] sm:$0xff]
      %v1955 = vld [vmem:[%s1943 + $0x58] sm:$0xff]
      %v1956 = vld [vmem:[%s1943 + $0x60] sm:$0xff]
      %v1957 = vld [vmem:[%s1943 + $0x68] sm:$0xff]
      %v1958 = vld [vmem:[%s1943 + $0x70] sm:$0xff]
      %v1959 = vld [vmem:[%s1943 + $0x78] sm:$0xff]
      %vm1992 = vcmask 1041409
      %v1993 = vsel %vm1992, %v1912, %v1911
      %vm1994 = vcmask 1042434
      %v1995 = vsel %vm1994, %v1913, %v1993
      %vm1996 = vcmask 1043459
      %v1997 = vsel %vm1996, %v1914, %v1995
      %vm1998 = vcmask 1044484
      %v1999 = vsel %vm1998, %v1915, %v1997
      %vm2000 = vcmask 1045509
      %v2001 = vsel %vm2000, %v1916, %v1999
      %vm2002 = vcmask 1046534
      %v2003 = vsel %vm2002, %v1917, %v2001
      %vm2004 = vcmask 1047559
      %v2005 = vsel %vm2004, %v1918, %v2003
      %v2006 = vsel %vm1992, %v1920, %v1919
      %v2007 = vsel %vm1994, %v1921, %v2006
      %v2008 = vsel %vm1996, %v1922, %v2007
      %v2009 = vsel %vm1998, %v1923, %v2008
      %v2010 = vsel %vm2000, %v1924, %v2009
      %v2011 = vsel %vm2002, %v1925, %v2010
      %v2012 = vsel %vm2004, %v1926, %v2011
      %v2013 = vsel %vm1992, %v1928, %v1927
      %v2014 = vsel %vm1994, %v1929, %v2013
      %v2015 = vsel %vm1996, %v1930, %v2014
      %v2016 = vsel %vm1998, %v1931, %v2015
      %v2017 = vsel %vm2000, %v1932, %v2016
      %v2018 = vsel %vm2002, %v1933, %v2017
      %v2019 = vsel %vm2004, %v1934, %v2018
      %v2020 = vsel %vm1992, %v1936, %v1935
      %v2021 = vsel %vm1994, %v1937, %v2020
      %v2022 = vsel %vm1996, %v1938, %v2021
      %v2023 = vsel %vm1998, %v1939, %v2022
      %v2024 = vsel %vm2000, %v1940, %v2023
      %v2025 = vsel %vm2002, %v1941, %v2024
      %v2026 = vsel %vm2004, %v1942, %v2025
      %2031 = vmatprep.subr.mxu0 0.0
      %2032 = vmatpush1.msra.mxu0 %v1944
      %2033 = vmatprep.subr.mxu0 0.0
      %2034 = vmatpush1.msra.mxu0 %v1945
      %2035 = vmatprep.subr.mxu0 0.0
      %2036 = vmatpush1.msra.mxu0 %v1946
      %2037 = vmatprep.subr.mxu0 0.0
      %2038 = vmatpush1.msra.mxu0 %v1947
      %2039 = vmatprep.subr.mxu0 0.0
      %2040 = vmatpush1.msra.mxu0 %v1948
      %2041 = vmatprep.subr.mxu0 0.0
      %2042 = vmatpush1.msra.mxu0 %v1949
      %2043 = vmatprep.subr.mxu0 0.0
      %2044 = vmatpush1.msra.mxu0 %v1950
      %2045 = vmatprep.subr.mxu0 0.0
      %2046 = vmatpush1.msra.mxu0 %v1951
      %2047 = vmatprep.subr.mxu0 0.0
      %2048 = vmatpush1.msra.mxu0 %v1952
      %2049 = vmatprep.subr.mxu0 0.0
      %2050 = vmatpush1.msra.mxu0 %v1953
      %2051 = vmatprep.subr.mxu0 0.0
      %2052 = vmatpush1.msra.mxu0 %v1954
      %2053 = vmatprep.subr.mxu0 0.0
      %2054 = vmatpush1.msra.mxu0 %v1955
      %2055 = vmatprep.subr.mxu0 0.0
      %2056 = vmatpush1.msra.mxu0 %v1956
      %2057 = vmatprep.subr.mxu0 0.0
      %2058 = vmatpush1.msra.mxu0 %v1957
      %2059 = vmatprep.subr.mxu0 0.0
      %2060 = vmatpush1.msra.mxu0 %v1958
      %2061 = vmatprep.subr.mxu0 0.0
      %2062 = vmatpush1.msra.mxu0 %v1959
      %2063 = vmatprep.subr.mxu0 0.0
      %2064 = vmatpush1.msra.mxu0 0.0
      %2065 = vmatprep.subr.mxu0 0.0
      %2066 = vmatpush1.msra.mxu0 0.0
      %2067 = vmatprep.subr.mxu0 0.0
      %2068 = vmatpush1.msra.mxu0 0.0
      %2069 = vmatprep.subr.mxu0 0.0
      %2070 = vmatpush1.msra.mxu0 0.0
      %2071 = vmatprep.subr.mxu0 0.0
      %2072 = vmatpush1.msra.mxu0 0.0
      %2073 = vmatprep.subr.mxu0 0.0
      %2074 = vmatpush1.msra.mxu0 0.0
      %2075 = vmatprep.subr.mxu0 0.0
      %2076 = vmatpush1.msra.mxu0 0.0
      %2077 = vmatprep.subr.mxu0 0.0
      %2078 = vmatpush1.msra.mxu0 0.0
      %2079 = vmatprep.subr.mxu0 0.0
      %2080 = vmatpush1.msra.mxu0 0.0
      %2081 = vmatprep.subr.mxu0 0.0
      %2082 = vmatpush1.msra.mxu0 0.0
      %2083 = vmatprep.subr.mxu0 0.0
      %2084 = vmatpush1.msra.mxu0 0.0
      %2085 = vmatprep.subr.mxu0 0.0
      %2086 = vmatpush1.msra.mxu0 0.0
      %2087 = vmatprep.subr.mxu0 0.0
      %2088 = vmatpush1.msra.mxu0 0.0
      %2089 = vmatprep.subr.mxu0 0.0
      %2090 = vmatpush1.msra.mxu0 0.0
      %2091 = vmatprep.subr.mxu0 0.0
      %2092 = vmatpush1.msra.mxu0 0.0
      %2093 = vmatprep.subr.mxu0 0.0
      %2094 = vmatpush1.msra.mxu0 0.0
      %2095 = vmatprep.mubr.f32.mxu0 0.0
      %2096 = vmatmul.mubr.f32.gmra.mrb[0].mxu0 %v2005
      %v2097 = vpop.f32.mrb[0].mxu0
      %v2098 = vadd.f32 0.0, %v2097
      %v2099 = vpop.f32.mrb[0].mxu0
      %2100 = vmatprep.mubr.f32.mxu0 0.0
      %2101 = vmatmul.mubr.f32.gmra.mrb[0].mxu0 %v2012
      %v2102 = vpop.f32.mrb[0].mxu0
      %v2103 = vadd.f32 0.0, %v2102
      %v2104 = vpop.f32.mrb[0].mxu0
      %2105 = vmatprep.mubr.f32.mxu0 0.0
      %2106 = vmatmul.mubr.f32.gmra.mrb[0].mxu0 %v2019
      %v2107 = vpop.f32.mrb[0].mxu0
      %v2108 = vadd.f32 0.0, %v2107
      %v2109 = vpop.f32.mrb[0].mxu0
      %2110 = vmatprep.mubr.f32.mxu0 0.0
      %2111 = vmatmul.mubr.f32.gmra.mrb[0].mxu0 %v2026
      %v2112 = vpop.f32.mrb[0].mxu0
      %v2113 = vadd.f32 0.0, %v2112
      %v2114 = vpop.f32.mrb[0].mxu0
      %2115 = vdwg.mxu0
      %v2116 = vmax.f32 %v2098, 0.0
      %v2117 = vmax.f32 %v2103, 0.0
      %v2118 = vmax.f32 %v2108, 0.0
      %v2119 = vmax.f32 %v2113, 0.0
      %vm2120 = vcmp.ne.f32.partialorder %v2098, %v2098
      %vm2121 = vcmp.ne.f32.partialorder %v2103, %v2103
      %vm2122 = vcmp.ne.f32.partialorder %v2108, %v2108
      %vm2123 = vcmp.ne.f32.partialorder %v2113, %v2113
      %v2124 = vadd.f32 %v2098, 0.0
      %v2125 = vadd.f32 %v2103, 0.0
      %v2126 = vadd.f32 %v2108, 0.0
      %v2127 = vadd.f32 %v2113, 0.0
      %v2128 = vand.u32 2147483647, %v2098
      %v2129 = vand.u32 2147483647, %v2103
      %v2130 = vand.u32 2147483647, %v2108
      %v2131 = vand.u32 2147483647, %v2113
      %v2132 = vsub.f32 0.0, %v2128
      %v2133 = vsub.f32 0.0, %v2129
      %v2134 = vsub.f32 0.0, %v2130
      %v2135 = vsub.f32 0.0, %v2131
      %v2136 = vmul.f32 %v2132, 1.442695
      %v2137 = vpow.pop %v2136
      %v2138 = vmul.f32 %v2133, 1.442695
      %v2139 = vpow.pop %v2138
      %v2140 = vmul.f32 %v2134, 1.442695
      %v2141 = vpow.pop %v2140
      %v2142 = vmul.f32 %v2135, 1.442695
      %v2143 = vpow.pop %v2142
      %v2144 = vadd.f32 %v2137, 1.0
      %v2145 = vlog2.pop %v2144
      %v2146 = vmul.f32 %v2145, 0.6931472
      %v2147 = vmul.f32 -0.5, %v2137
      %v2148 = vadd.f32 %v2147, 1.0
      %v2149 = vmul.f32 %v2148, %v2137
      %v2150 = vand.u32 2147483647, %v2137
      %vm2151 = vcmp.lt.f32.partialorder %v2150, 0.0004427343
      %v2152 = vsel %vm2151, %v2149, %v2146
      %v2153 = vadd.f32 %v2139, 1.0
      %v2154 = vlog2.pop %v2153
      %v2155 = vmul.f32 %v2154, 0.6931472
      %v2156 = vmul.f32 -0.5, %v2139
      %v2157 = vadd.f32 %v2156, 1.0
      %v2158 = vmul.f32 %v2157, %v2139
      %v2159 = vand.u32 2147483647, %v2139
      %vm2160 = vcmp.lt.f32.partialorder %v2159, 0.0004427343
      %v2161 = vsel %vm2160, %v2158, %v2155
      %v2162 = vadd.f32 %v2141, 1.0
      %v2163 = vlog2.pop %v2162
      %v2164 = vmul.f32 %v2163, 0.6931472
      %v2165 = vmul.f32 -0.5, %v2141
      %v2166 = vadd.f32 %v2165, 1.0
      %v2167 = vmul.f32 %v2166, %v2141
      %v2168 = vand.u32 2147483647, %v2141
      %vm2169 = vcmp.lt.f32.partialorder %v2168, 0.0004427343
      %v2170 = vsel %vm2169, %v2167, %v2164
      %v2171 = vadd.f32 %v2143, 1.0
      %v2172 = vlog2.pop %v2171
      %v2173 = vmul.f32 %v2172, 0.6931472
      %v2174 = vmul.f32 -0.5, %v2143
      %v2175 = vadd.f32 %v2174, 1.0
      %v2176 = vmul.f32 %v2175, %v2143
      %v2177 = vand.u32 2147483647, %v2143
      %vm2178 = vcmp.lt.f32.partialorder %v2177, 0.0004427343
      %v2179 = vsel %vm2178, %v2176, %v2173
      %v2180 = vadd.f32 %v2116, %v2152
      %v2181 = vadd.f32 %v2117, %v2161
      %v2182 = vadd.f32 %v2118, %v2170
      %v2183 = vadd.f32 %v2119, %v2179
      %v2184 = vsel %vm2120, %v2124, %v2180
      %v2185 = vsel %vm2121, %v2125, %v2181
      %v2186 = vsel %vm2122, %v2126, %v2182
      %v2187 = vsel %vm2123, %v2127, %v2183
      %v2188 = vld [vmem:[%s215] sm:$0xff]
      %v2189 = vld [vmem:[%s215 + $0x8] sm:$0xff]
      %v2190 = vld [vmem:[%s215 + $0x10] sm:$0xff]
      %v2191 = vld [vmem:[%s215 + $0x18] sm:$0xff]
      %2196 = vrot.lane.b32.xlu0 %v2184, 64
      %v2197 = vpop.permute.xlu0 %2196
      %2198 = vrot.lane.b32.xlu0 %v2185, 64
      %v2199 = vpop.permute.xlu0 %2198
      %2200 = vrot.lane.b32.xlu0 %v2186, 64
      %v2201 = vpop.permute.xlu0 %2200
      %2202 = vrot.lane.b32.xlu0 %v2187, 64
      %v2203 = vpop.permute.xlu0 %2202
      %v2208 = vmul.f32 %v2188, %v2197
      %v2209 = vmul.f32 %v2189, %v2199
      %v2210 = vmul.f32 %v2190, %v2201
      %v2211 = vmul.f32 %v2191, %v2203
      %v2212 = vadd.f32 %v2208, %v2098
      %v2213 = vadd.f32 %v2209, %v2103
      %v2214 = vadd.f32 %v2210, %v2108
      %v2215 = vadd.f32 %v2211, %v2113
      %v2216 = vmul.f32 %v2212, 0.5
      %v2217 = vmul.f32 %v2213, 0.5
      %v2218 = vmul.f32 %v2214, 0.5
      %v2219 = vmul.f32 %v2215, 0.5
      %v2220 = vmul.f32 %v2216, %v2212
      %v2221 = vmul.f32 %v2217, %v2213
      %v2222 = vmul.f32 %v2218, %v2214
      %v2223 = vmul.f32 %v2219, %v2215
      %v2224 = vsub.f32 %v2212, %v2098
      %v2225 = vsub.f32 %v2213, %v2103
      %v2226 = vsub.f32 %v2214, %v2108
      %v2227 = vsub.f32 %v2215, %v2113
      %v2228 = vadd.f32 %v2184, 1e-10
      %v2229 = vadd.f32 %v2185, 1e-10
      %v2230 = vadd.f32 %v2186, 1e-10
      %v2231 = vadd.f32 %v2187, 1e-10
      %2236 = vrot.lane.b32.xlu0 %v2228, 64
      %v2237 = vpop.permute.xlu0 %2236
      %2238 = vrot.lane.b32.xlu0 %v2229, 64
      %v2239 = vpop.permute.xlu0 %2238
      %2240 = vrot.lane.b32.xlu0 %v2230, 64
      %v2241 = vpop.permute.xlu0 %2240
      %2242 = vrot.lane.b32.xlu0 %v2231, 64
      %v2243 = vpop.permute.xlu0 %2242
      %v2248 = vrcp.pop %v2237
      %v2249 = vmul.f32 %v2224, %v2248
      %v2250 = vrcp.pop %v2239
      %v2251 = vmul.f32 %v2225, %v2250
      %v2252 = vrcp.pop %v2241
      %v2253 = vmul.f32 %v2226, %v2252
      %v2254 = vrcp.pop %v2243
      %v2255 = vmul.f32 %v2227, %v2254
      %v2256 = vmul.f32 %v2249, %v2249
      %v2257 = vmul.f32 %v2251, %v2251
      %v2258 = vmul.f32 %v2253, %v2253
      %v2259 = vmul.f32 %v2255, %v2255
      %v2260 = vmul.f32 %v2256, 0.5
      %v2261 = vmul.f32 %v2257, 0.5
      %v2262 = vmul.f32 %v2258, 0.5
      %v2263 = vmul.f32 %v2259, 0.5
      %v2264 = vsub.f32 %v2220, %v2260
      %v2265 = vsub.f32 %v2221, %v2261
      %v2266 = vsub.f32 %v2222, %v2262
      %v2267 = vsub.f32 %v2223, %v2263
      %v2268 = vlog2.pop %v2228
      %v2269 = vmul.f32 %v2268, 0.6931472
      %v2270 = vlog2.pop %v2229
      %v2271 = vmul.f32 %v2270, 0.6931472
      %v2272 = vlog2.pop %v2230
      %v2273 = vmul.f32 %v2272, 0.6931472
      %v2274 = vlog2.pop %v2231
      %v2275 = vmul.f32 %v2274, 0.6931472
      %2280 = vrot.lane.b32.xlu0 %v2269, 64
      %v2281 = vpop.permute.xlu0 %2280
      %2282 = vrot.lane.b32.xlu0 %v2271, 64
      %v2283 = vpop.permute.xlu0 %2282
      %2284 = vrot.lane.b32.xlu0 %v2273, 64
      %v2285 = vpop.permute.xlu0 %2284
      %2286 = vrot.lane.b32.xlu0 %v2275, 64
      %v2287 = vpop.permute.xlu0 %2286
      %v2292 = vsub.f32 %v2264, %v2281
      %v2293 = vsub.f32 %v2265, %v2283
      %v2294 = vsub.f32 %v2266, %v2285
      %v2295 = vsub.f32 %v2267, %v2287
      %2300 = vrot.lane.b32.xlu0 %v2292, 64
      %v2301 = vpop.permute.xlu0 %2300
      %2302 = vrot.lane.b32.xlu0 %v2293, 64
      %v2303 = vpop.permute.xlu0 %2302
      %2304 = vrot.lane.b32.xlu0 %v2294, 64
      %v2305 = vpop.permute.xlu0 %2304
      %2306 = vrot.lane.b32.xlu0 %v2295, 64
      %v2307 = vpop.permute.xlu0 %2306
      %vm2312 = vcmask 523264
      %v2313 = vsel %vm2312, %v2212, %v2301
      %v2314 = vsel %vm2312, %v2213, %v2303
      %v2315 = vsel %vm2312, %v2214, %v2305
      %v2316 = vsel %vm2312, %v2215, %v2307
      %2317 = vst [vmem:[%s221] sm:$0xff] %v2313
      %2318 = vst [vmem:[%s221 + $0x8] sm:$0xff] %v2314
      %2319 = vst [vmem:[%s221 + $0x10] sm:$0xff] %v2315
      %2320 = vst [vmem:[%s221 + $0x18] sm:$0xff] %v2316
      %s2321 = smul.u32 4, %s15
      %p2322 = scmp.lt.s32.totalorder %s2321, 7
      %s2323 = scalar_select %p2322, %s2321, 7
      %s2324 = smul.addr %s2323, 8
      %s2325 = scalar_lea.vmem %s4, %s2324
      // Predicated region
      $region37: #{encoding_network_forward.1} parent=35 // pred_check
        %p2326 = pneg %p127
      $region38: #{encoding_network_forward.1} parent=35 // pred_check_branch
        %2328 = sbr.rel (%p2326) target = $region40
      $region39: #{encoding_network_forward.1} parent=35 // pred_region
        %s2329 = smul.u32 4, %s15
      $region40: #{encoding_network_forward.1} parent=35 // pred_fallthru
        _
    $region36: #{encoding_network_forward.1} parent=5 // pred_fallthru
      _
    %p2330 = scmp.le.s32.totalorder 2, %s10
    // Predicated region
    $region41: #{encoding_network_forward.1} parent=5 // pred_check
      %p2331 = pneg %p2330
    $region42: #{encoding_network_forward.1} parent=5 // pred_check_branch
      %2333 = sbr.rel (%p2331) target = $region44
    $region43: #{encoding_network_forward.1} parent=5 // pred_region
      %s2334 = ssub.s32 %s10, 2
      // Predicated region
      $region45: #{encoding_network_forward.1} parent=43 // pred_check
        %p2335 = pneg %p133
      $region46: #{encoding_network_forward.1} parent=43 // pred_check_branch
        %2337 = sbr.rel (%p2335) target = $region48
      $region47: #{encoding_network_forward.1} parent=43 // pred_region
        %s2338 = smul.u32 4, %s16
        %p2339 = scmp.lt.s32.totalorder %s2338, 7
        %s2340 = scalar_select %p2339, %s2338, 7
        %s2341 = smul.addr %s2340, 8
        %s2342 = scalar_lea.vmem %s4, %s2341
      $region48: #{encoding_network_forward.1} parent=43 // pred_fallthru
        _
    $region44: #{encoding_network_forward.1} parent=5 // pred_fallthru
      _
  $region6: #{encoding_network_forward.1} parent=0 // loop_footer
    %s14 = sadd.s32 1, %s10
  $region7: #{encoding_network_forward.1} parent=0 // loop_footer_branch
    %9 = sbr.rel target = $region3
  $region8: #{encoding_network_forward.1} parent=0 // loop_exit
    _

</llo_original>
